<compile_context>
chip_gen: v6e
topology: v6e:2x2x1
jax: 0.10.0
libtpu: 0.0.40
codegen_flags: <defaults>
</compile_context>

<pallas_src>
import functools

import jax
import jax.numpy as jnp
import numpy as np
from jax.experimental import pallas as pl
from jax.experimental.pallas import tpu as pltpu

LANE = 128
PAIR_TI = 32     # pair-tile rows  (multiple of 8)
PAIR_TJ = 128    # pair-tile cols  (multiple of 128 -> lane-dense output stores)


def _round_up(v, m):
    return ((v + m - 1) // m) * m


def _pad_to(x, shape):
    return jnp.pad(x, [(0, s - d) for s, d in zip(shape, x.shape)])


# ----------------------------------------------------------------------------
# GCN ("SimpleNetDeep") kernel — batched over the grid, whole (padded) graph per step.
# For table-recognition graph sizes (N up to ~1–2K words) A^ fits comfortably in VMEM.
# TODO(synk): SimpleNetDeep's exact layer stack is not given in the source file;
#             implemented as 3 graph-conv layers (ReLU on the first two).
# ----------------------------------------------------------------------------
def gcn_kernel(a_ref, x_ref, w1_ref, b1_ref, w2_ref, b2_ref, w3_ref, b3_ref, g_ref,
               *, mxu_dtype):
    a = a_ref[0]                                   # [N_pad, N_pad] f32

    def mm(l, r):                                  # MXU matmul, f32 accumulation
        return jnp.dot(l.astype(mxu_dtype), r.astype(mxu_dtype),
                       preferred_element_type=jnp.float32)

    h = mm(x_ref[0], w1_ref[...])
    h = jnp.maximum(mm(a, h) + b1_ref[...], 0.0)
    h = mm(h, w2_ref[...])
    h = jnp.maximum(mm(a, h) + b2_ref[...], 0.0)
    h = mm(h, w3_ref[...])
    g_ref[0] = mm(a, h) + b3_ref[...]


def run_gcn(a, x, gcn_w, mxu_dtype):
    bsz, n_pad, _ = a.shape
    din_p = x.shape[2]
    w1, b1, w2, b2, w3, b3 = gcn_w
    gout_p = w3.shape[1]
    const2 = lambda b: (0, 0)
    kernel = functools.partial(gcn_kernel, mxu_dtype=mxu_dtype)
    return pl.pallas_call(
        kernel,
        out_shape=jax.ShapeDtypeStruct((bsz, n_pad, gout_p), jnp.float32),
        grid_spec=pltpu.PrefetchScalarGridSpec(
            num_scalar_prefetch=0,
            grid=(bsz,),
            in_specs=[
                pl.BlockSpec((1, n_pad, n_pad), lambda b: (b, 0, 0)),
                pl.BlockSpec((1, n_pad, din_p), lambda b: (b, 0, 0)),
                pl.BlockSpec(w1.shape, const2),
                pl.BlockSpec(b1.shape, const2),
                pl.BlockSpec(w2.shape, const2),
                pl.BlockSpec(b2.shape, const2),
                pl.BlockSpec(w3.shape, const2),
                pl.BlockSpec(b3.shape, const2),
            ],
            out_specs=pl.BlockSpec((1, n_pad, gout_p), lambda b: (b, 0, 0)),
        ),
        compiler_params=pltpu.CompilerParams(
            dimension_semantics=("parallel",),
            vmem_limit_bytes=32 * 1024 * 1024),
    )(a, x, w1, b1, w2, b2, w3, b3)


# ----------------------------------------------------------------------------
# all-pairs abs_dist + fused classification heads kernel (tiled over (b, i, j))
# TODO(synk): head_v1's exact MLP is not given; implemented as Linear->ReLU->Linear logits.
# ----------------------------------------------------------------------------
def pair_heads_kernel(gi_ref, gj_ref, w1_ref, b1_ref, w2c_ref, w2k_ref, w2r_ref, b2_ref,
                      cells_ref, cols_ref, rows_ref, *, mxu_dtype):
    gi = gi_ref[0]                                  # [TI, F_pad] f32
    gj = gj_ref[0]                                  # [TJ, F_pad] f32
    ti, f = gi.shape
    tj = gj.shape[0]

    # abs_dist tile: d[i*TJ+j, :] = |g_i - g_j|   (TJ multiple of 8 -> layout-safe reshape)
    d = jnp.abs(gi[:, None, :] - gj[None, :, :]).reshape(ti * tj, f)

    # fused first layers of all three heads: one wide MXU matmul, f32 accumulation
    h = jnp.dot(d.astype(mxu_dtype), w1_ref[...].astype(mxu_dtype),
                preferred_element_type=jnp.float32) + b1_ref[...]
    h = jnp.maximum(h, 0.0)                         # [TI*TJ, HW_pad]
    hw = h.shape[1]
    h3 = h.reshape(ti, tj, hw)                      # [TI, TJ, HW_pad]

    # second layers as VPU multiply + full-lane reduce (w2 vectors are zero outside
    # their head's lane slice), giving lane-dense [TI, TJ] logits per head.
    def head(w2_ref, bias):
        return jnp.sum(h3 * w2_ref[...].reshape(1, 1, hw), axis=-1) + bias

    cells_ref[0] = head(w2c_ref, b2_ref[0])
    cols_ref[0] = head(w2k_ref, b2_ref[1])
    rows_ref[0] = head(w2r_ref, b2_ref[2])


def run_pair_heads(g, w1_all, b1_all, w2c, w2k, w2r, b2_all, mxu_dtype,
                   ti=PAIR_TI, tj=PAIR_TJ):
    bsz, n_pad, gout_p = g.shape
    hw_p = w1_all.shape[1]
    const2 = lambda b, i, j: (0, 0)
    kernel = functools.partial(pair_heads_kernel, mxu_dtype=mxu_dtype)
    out_shape = jax.ShapeDtypeStruct((bsz, n_pad, n_pad), jnp.float32)
    out_spec = pl.BlockSpec((1, ti, tj), lambda b, i, j: (b, i, j))
    return pl.pallas_call(
        kernel,
        out_shape=(out_shape, out_shape, out_shape),
        grid_spec=pltpu.PrefetchScalarGridSpec(
            num_scalar_prefetch=0,
            grid=(bsz, n_pad // ti, n_pad // tj),
            in_specs=[
                pl.BlockSpec((1, ti, gout_p), lambda b, i, j: (b, i, 0)),
                pl.BlockSpec((1, tj, gout_p), lambda b, i, j: (b, j, 0)),
                pl.BlockSpec((gout_p, hw_p), const2),
                pl.BlockSpec((1, hw_p), const2),
                pl.BlockSpec((1, hw_p), const2),
                pl.BlockSpec((1, hw_p), const2),
                pl.BlockSpec((1, hw_p), const2),
                pl.BlockSpec(memory_space=pltpu.MemorySpace.SMEM),   # per-head scalar biases
            ],
            out_specs=[out_spec, out_spec, out_spec],
        ),
        compiler_params=pltpu.CompilerParams(
            dimension_semantics=("parallel", "parallel", "parallel"),
            vmem_limit_bytes=32 * 1024 * 1024),
    )(g, g, w1_all, b1_all, w2c, w2k, w2r, b2_all)


# ----------------------------------------------------------------------------
# JAX glue
# ----------------------------------------------------------------------------
def normalized_adjacency(edge_index, n):
    a = jnp.zeros((n, n), jnp.float32)
    a = a.at[edge_index[0], edge_index[1]].set(1.0)
    a = jnp.maximum(a, a.T) + jnp.eye(n, dtype=jnp.float32)
    d_inv_sqrt = 1.0 / jnp.sqrt(a.sum(axis=1))
    return a * d_inv_sqrt[:, None] * d_inv_sqrt[None, :]


def vexmout_forward(data_dict, gcnn_params, head_cells, head_cols, head_rows,
                    mxu_dtype=jnp.float32):
    """Eval-branch forward (self.training == False) of VexMoutNet.
    TODO(synk): feature_net / slice_gather path and the training/sampling branch are not
                implemented (default config uses simplest_gather(): pass-through features).
    """
    vfs = data_dict["vertex_features"]
    eis = data_dict["edge_indexes"]
    nws = [int(n) for n in data_dict["num_words"]]
    bsz = len(vfs)

    w1, b1, w2, b2, w3, b3 = gcnn_params
    d_in, hid = w1.shape
    hid2 = w2.shape[1]
    gout = w3.shape[1]
    din_p, hid_p, hid2_p, gout_p = (_round_up(v, LANE) for v in (d_in, hid, hid2, gout))

    # bucket the whole batch to a common padded N (multiple of the pair tile sizes)
    n_pad = max(_round_up(max(nws), PAIR_TJ), PAIR_TJ)

    xs, ahs = [], []
    for i in range(bsz):
        n = nws[i]
        x = vfs[i][:n].astype(jnp.float32)                 # slice to num_words[i]
        a = normalized_adjacency(eis[i], n)
        xs.append(_pad_to(x, (n_pad, din_p)))
        ahs.append(_pad_to(a, (n_pad, n_pad)))
    x_b = jnp.stack(xs)
    a_b = jnp.stack(ahs)

    gcn_w = (_pad_to(w1, (din_p, hid_p)), _pad_to(b1, (1, hid_p)),
             _pad_to(w2, (hid_p, hid2_p)), _pad_to(b2, (1, hid2_p)),
             _pad_to(w3, (hid2_p, gout_p)), _pad_to(b3, (1, gout_p)))
    g = run_gcn(a_b, x_b, gcn_w, mxu_dtype)                # [B, N_pad, GOUT_pad]

    # pack the three heads: first layers side-by-side in the lane axis, second layers
    # as zero-masked lane vectors, biases as SMEM scalars.
    hh = head_cells[0].shape[1]
    assert head_cols[0].shape[1] == hh and head_rows[0].shape[1] == hh
    hw_p = _round_up(3 * hh, LANE)

    w1_all = jnp.zeros((gout_p, hw_p), jnp.float32)
    b1_all = jnp.zeros((1, hw_p), jnp.float32)
    w2_vecs = []
    b2_list = []
    for idx, (hw1, hb1, hw2, hb2) in enumerate((head_cells, head_cols, head_rows)):
        lo = idx * hh
        w1_all = w1_all.at[:gout, lo:lo + hh].set(hw1)
        b1_all = b1_all.at[:, lo:lo + hh].set(hb1)
        w2_vecs.append(jnp.zeros((1, hw_p), jnp.float32).at[0, lo:lo + hh].set(hw2.reshape(-1)))
        b2_list.append(hb2.reshape(-1))
    b2_all = jnp.concatenate(b2_list)                      # (3,) f32, lives in SMEM

    cells, cols, rows = run_pair_heads(g, w1_all, b1_all, w2_vecs[0], w2_vecs[1],
                                       w2_vecs[2], b2_all, mxu_dtype)

    out = {"cells": [], "cols": [], "rows": []}
    for i in range(bsz):
        n = nws[i]
        out["cells"].append(cells[i, :n, :n].reshape(n * n, 1))
        out["cols"].append(cols[i, :n, :n].reshape(n * n, 1))
        out["rows"].append(rows[i, :n, :n].reshape(n * n, 1))
    return {k: jnp.concatenate(v, axis=0) for k, v in out.items()}


# pure-JAX reference (sanity check of the Pallas kernels)
def reference_forward(data_dict, gcnn_params, head_cells, head_cols, head_rows):
    w1, b1, w2, b2, w3, b3 = gcnn_params
    outs = {"cells": [], "cols": [], "rows": []}
    for i in range(len(data_dict["vertex_features"])):
        n = int(data_dict["num_words"][i])
        x = data_dict["vertex_features"][i][:n]
        a = normalized_adjacency(data_dict["edge_indexes"][i], n)
        h = jnp.maximum(a @ (x @ w1) + b1, 0.0)
        h = jnp.maximum(a @ (h @ w2) + b2, 0.0)
        g = a @ (h @ w3) + b3
        d = jnp.abs(g[:, None, :] - g[None, :, :]).reshape(n * n, -1)
        for name, (hw1, hb1, hw2, hb2) in (("cells", head_cells), ("cols", head_cols),
                                           ("rows", head_rows)):
            hh = jnp.maximum(d @ hw1 + hb1, 0.0)
            outs[name].append(hh @ hw2 + hb2)
    return {k: jnp.concatenate(v, axis=0) for k, v in outs.items()}


if __name__ == "__main__":
    D_IN, HID, GOUT, HHID, E = 8, 64, 16, 32, 48
    NS = [40, 24]                                  # per-sample word counts (batch of 2)

    key = jax.random.PRNGKey(0)
    ks = jax.random.split(key, 24)

    def linear(kw, kb, fi, fo, scale=0.2):
        return (scale * jax.random.normal(kw, (fi, fo), jnp.float32),
                0.01 * jax.random.normal(kb, (1, fo), jnp.float32))

    # gcnn (SimpleNetDeep) params: D_IN -> HID -> HID -> GOUT
    w1, b1 = linear(ks[0], ks[1], D_IN, HID)
    w2, b2 = linear(ks[2], ks[3], HID, HID)
    w3, b3 = linear(ks[4], ks[5], HID, GOUT)
    gcnn_params = (w1, b1, w2, b2, w3, b3)

    # three head_v1 heads: GOUT -> HHID -> 1 (logits)
    def make_head(k0, k1, k2, k3):
        hw1, hb1 = linear(k0, k1, GOUT, HHID)
        hw2, hb2 = linear(k2, k3, HHID, 1)
        return (hw1, hb1, hw2, hb2)

    head_cells = make_head(ks[6], ks[7], ks[8], ks[9])
    head_cols = make_head(ks[10], ks[11], ks[12], ks[13])
    head_rows = make_head(ks[14], ks[15], ks[16], ks[17])

    # deterministic synthetic batch (different n per sample exercises padding/slicing)
    vertex_features = [jax.random.normal(ks[18 + i], (NS[i], D_IN), jnp.float32)
                       for i in range(len(NS))]
    edge_indexes = [jax.random.randint(ks[20 + i], (2, E), 0, NS[i], jnp.int32)
                    for i in range(len(NS))]
    data_dict = {"vertex_features": vertex_features,
                 "edge_indexes": edge_indexes,
                 "num_words": NS}

    ref = reference_forward(data_dict, gcnn_params, head_cells, head_cols, head_rows)
    total_pairs = sum(n * n for n in NS)

    # f32 MXU path: bit-faithful check against the reference
    pred = vexmout_forward(data_dict, gcnn_params, head_cells, head_cols, head_rows,
                           mxu_dtype=jnp.float32)
    jax.block_until_ready(pred)
    for name in ("cells", "cols", "rows"):
        assert pred[name].shape == (total_pairs, 1)
        np.testing.assert_allclose(np.asarray(pred[name]), np.asarray(ref[name]),
                                   rtol=1e-4, atol=1e-4)

    # bf16 MXU path (v6e/v7x perf lever): loose check, f32 accumulation inside the kernels
    pred_bf16 = vexmout_forward(data_dict, gcnn_params, head_cells, head_cols, head_rows,
                                mxu_dtype=jnp.bfloat16)
    jax.block_until_ready(pred_bf16)
    for name in ("cells", "cols", "rows"):
        np.testing.assert_allclose(np.asarray(pred_bf16[name]), np.asarray(ref[name]),
                                   rtol=1e-1, atol=1e-1)

    print("KERNEL_OK")
</pallas_src>

<mosaic_0001>
module attributes {stable_mosaic.version = 11 : i64} {
  func.func @gcn_kernel(%arg0: i32, %arg1: memref<1x128x128xf32, #tpu.memory_space<vmem>>, %arg2: memref<1x128x128xf32, #tpu.memory_space<vmem>>, %arg3: memref<128x128xf32, #tpu.memory_space<vmem>>, %arg4: memref<1x128xf32, #tpu.memory_space<vmem>>, %arg5: memref<128x128xf32, #tpu.memory_space<vmem>>, %arg6: memref<1x128xf32, #tpu.memory_space<vmem>>, %arg7: memref<128x128xf32, #tpu.memory_space<vmem>>, %arg8: memref<1x128xf32, #tpu.memory_space<vmem>>, %arg9: memref<1x128x128xf32, #tpu.memory_space<vmem>>) attributes {dimension_semantics = [#tpu.dimension_semantics<parallel>], iteration_bounds = array<i64: 2>, scalar_prefetch = 0 : i64, scratch_operands = 0 : i64, tpu.core_type = #tpu.core_type<tc>, window_params = [{transform_indices = @transform_0, window_bounds = array<i64: 1, 128, 128>}, {transform_indices = @transform_1, window_bounds = array<i64: 1, 128, 128>}, {pipeline_mode = #tpu.pipeline_mode<synchronous>, transform_indices = @transform_2, window_bounds = array<i64: 128, 128>}, {pipeline_mode = #tpu.pipeline_mode<synchronous>, transform_indices = @transform_3, window_bounds = array<i64: 1, 128>}, {pipeline_mode = #tpu.pipeline_mode<synchronous>, transform_indices = @transform_4, window_bounds = array<i64: 128, 128>}, {pipeline_mode = #tpu.pipeline_mode<synchronous>, transform_indices = @transform_5, window_bounds = array<i64: 1, 128>}, {pipeline_mode = #tpu.pipeline_mode<synchronous>, transform_indices = @transform_6, window_bounds = array<i64: 128, 128>}, {pipeline_mode = #tpu.pipeline_mode<synchronous>, transform_indices = @transform_7, window_bounds = array<i64: 1, 128>}, {transform_indices = @transform_8, window_bounds = array<i64: 1, 128, 128>}]} {
    %c0 = arith.constant 0 : index
    %c0_0 = arith.constant 0 : index
    %c0_1 = arith.constant 0 : index
    %0 = vector.load %arg1[%c0, %c0_0, %c0_1] : memref<1x128x128xf32, #tpu.memory_space<vmem>>, vector<1x128x128xf32>
    %1 = vector.shape_cast %0 : vector<1x128x128xf32> to vector<128x128xf32>
    %c0_2 = arith.constant 0 : index
    %c0_3 = arith.constant 0 : index
    %c0_4 = arith.constant 0 : index
    %2 = vector.load %arg2[%c0_2, %c0_3, %c0_4] : memref<1x128x128xf32, #tpu.memory_space<vmem>>, vector<1x128x128xf32>
    %3 = vector.shape_cast %2 : vector<1x128x128xf32> to vector<128x128xf32>
    %c0_5 = arith.constant 0 : index
    %c0_6 = arith.constant 0 : index
    %4 = vector.load %arg3[%c0_5, %c0_6] : memref<128x128xf32, #tpu.memory_space<vmem>>, vector<128x128xf32>
    %cst = arith.constant dense<0.000000e+00> : vector<128x128xf32>
    %5 = tpu.matmul %3, %4, %cst {dimension_numbers = #tpu.dot_dimension_numbers<[1], [0], [0], [1], [0, 0, 1, 1], [], []>} : vector<128x128xf32>, vector<128x128xf32>, vector<128x128xf32> -> vector<128x128xf32>
    %cst_7 = arith.constant dense<0.000000e+00> : vector<128x128xf32>
    %6 = tpu.matmul %1, %5, %cst_7 {dimension_numbers = #tpu.dot_dimension_numbers<[1], [0], [0], [1], [0, 0, 1, 1], [], []>} : vector<128x128xf32>, vector<128x128xf32>, vector<128x128xf32> -> vector<128x128xf32>
    %c0_8 = arith.constant 0 : index
    %c0_9 = arith.constant 0 : index
    %7 = vector.load %arg4[%c0_8, %c0_9] : memref<1x128xf32, #tpu.memory_space<vmem>>, vector<1x128xf32>
    %8 = vector.broadcast %7 : vector<1x128xf32> to vector<128x128xf32>
    %9 = arith.addf %6, %8 : vector<128x128xf32>
    %cst_10 = arith.constant 0.000000e+00 : f32
    %10 = vector.broadcast %cst_10 : f32 to vector<128x128xf32>
    %11 = arith.maximumf %9, %10 : vector<128x128xf32>
    %c0_11 = arith.constant 0 : index
    %c0_12 = arith.constant 0 : index
    %12 = vector.load %arg5[%c0_11, %c0_12] : memref<128x128xf32, #tpu.memory_space<vmem>>, vector<128x128xf32>
    %cst_13 = arith.constant dense<0.000000e+00> : vector<128x128xf32>
    %13 = tpu.matmul %11, %12, %cst_13 {dimension_numbers = #tpu.dot_dimension_numbers<[1], [0], [0], [1], [0, 0, 1, 1], [], []>} : vector<128x128xf32>, vector<128x128xf32>, vector<128x128xf32> -> vector<128x128xf32>
    %cst_14 = arith.constant dense<0.000000e+00> : vector<128x128xf32>
    %14 = tpu.matmul %1, %13, %cst_14 {dimension_numbers = #tpu.dot_dimension_numbers<[1], [0], [0], [1], [0, 0, 1, 1], [], []>} : vector<128x128xf32>, vector<128x128xf32>, vector<128x128xf32> -> vector<128x128xf32>
    %c0_15 = arith.constant 0 : index
    %c0_16 = arith.constant 0 : index
    %15 = vector.load %arg6[%c0_15, %c0_16] : memref<1x128xf32, #tpu.memory_space<vmem>>, vector<1x128xf32>
    %16 = vector.broadcast %15 : vector<1x128xf32> to vector<128x128xf32>
    %17 = arith.addf %14, %16 : vector<128x128xf32>
    %cst_17 = arith.constant 0.000000e+00 : f32
    %18 = vector.broadcast %cst_17 : f32 to vector<128x128xf32>
    %19 = arith.maximumf %17, %18 : vector<128x128xf32>
    %c0_18 = arith.constant 0 : index
    %c0_19 = arith.constant 0 : index
    %20 = vector.load %arg7[%c0_18, %c0_19] : memref<128x128xf32, #tpu.memory_space<vmem>>, vector<128x128xf32>
    %cst_20 = arith.constant dense<0.000000e+00> : vector<128x128xf32>
    %21 = tpu.matmul %19, %20, %cst_20 {dimension_numbers = #tpu.dot_dimension_numbers<[1], [0], [0], [1], [0, 0, 1, 1], [], []>} : vector<128x128xf32>, vector<128x128xf32>, vector<128x128xf32> -> vector<128x128xf32>
    %cst_21 = arith.constant dense<0.000000e+00> : vector<128x128xf32>
    %22 = tpu.matmul %1, %21, %cst_21 {dimension_numbers = #tpu.dot_dimension_numbers<[1], [0], [0], [1], [0, 0, 1, 1], [], []>} : vector<128x128xf32>, vector<128x128xf32>, vector<128x128xf32> -> vector<128x128xf32>
    %c0_22 = arith.constant 0 : index
    %c0_23 = arith.constant 0 : index
    %23 = vector.load %arg8[%c0_22, %c0_23] : memref<1x128xf32, #tpu.memory_space<vmem>>, vector<1x128xf32>
    %24 = vector.broadcast %23 : vector<1x128xf32> to vector<128x128xf32>
    %25 = arith.addf %22, %24 : vector<128x128xf32>
    %c0_24 = arith.constant 0 : index
    %c0_25 = arith.constant 0 : index
    %c0_26 = arith.constant 0 : index
    %26 = vector.load %arg9[%c0_24, %c0_25, %c0_26] : memref<1x128x128xf32, #tpu.memory_space<vmem>>, vector<1x128x128xf32>
    %27 = vector.shape_cast %26 : vector<1x128x128xf32> to vector<128x128xf32>
    %28 = vector.shape_cast %25 : vector<128x128xf32> to vector<1x128x128xf32>
    tpu.vector_store %arg9[%c0_24, %c0_25, %c0_26], %28 {strides = array<i32>} : memref<1x128x128xf32, #tpu.memory_space<vmem>>, vector<1x128x128xf32>,
    return
  }
  func.func @transform_0(%arg0: i32) -> (i32, i32, i32) {
    %c0_i32 = arith.constant 0 : i32
    %c0_i32_0 = arith.constant 0 : i32
    %c0_i32_1 = arith.constant 0 : i32
    return %arg0, %c0_i32, %c0_i32_0 : i32, i32, i32
  }
  func.func @transform_1(%arg0: i32) -> (i32, i32, i32) {
    %c0_i32 = arith.constant 0 : i32
    %c0_i32_0 = arith.constant 0 : i32
    %c0_i32_1 = arith.constant 0 : i32
    return %arg0, %c0_i32, %c0_i32_0 : i32, i32, i32
  }
  func.func @transform_2(%arg0: i32) -> (i32, i32) {
    %c0_i32 = arith.constant 0 : i32
    %c0_i32_0 = arith.constant 0 : i32
    %c0_i32_1 = arith.constant 0 : i32
    return %c0_i32, %c0_i32_0 : i32, i32
  }
  func.func @transform_3(%arg0: i32) -> (i32, i32) {
    %c0_i32 = arith.constant 0 : i32
    %c0_i32_0 = arith.constant 0 : i32
    %c0_i32_1 = arith.constant 0 : i32
    return %c0_i32, %c0_i32_0 : i32, i32
  }
  func.func @transform_4(%arg0: i32) -> (i32, i32) {
    %c0_i32 = arith.constant 0 : i32
    %c0_i32_0 = arith.constant 0 : i32
    %c0_i32_1 = arith.constant 0 : i32
    return %c0_i32, %c0_i32_0 : i32, i32
  }
  func.func @transform_5(%arg0: i32) -> (i32, i32) {
    %c0_i32 = arith.constant 0 : i32
    %c0_i32_0 = arith.constant 0 : i32
    %c0_i32_1 = arith.constant 0 : i32
    return %c0_i32, %c0_i32_0 : i32, i32
  }
  func.func @transform_6(%arg0: i32) -> (i32, i32) {
    %c0_i32 = arith.constant 0 : i32
    %c0_i32_0 = arith.constant 0 : i32
    %c0_i32_1 = arith.constant 0 : i32
    return %c0_i32, %c0_i32_0 : i32, i32
  }
  func.func @transform_7(%arg0: i32) -> (i32, i32) {
    %c0_i32 = arith.constant 0 : i32
    %c0_i32_0 = arith.constant 0 : i32
    %c0_i32_1 = arith.constant 0 : i32
    return %c0_i32, %c0_i32_0 : i32, i32
  }
  func.func @transform_8(%arg0: i32) -> (i32, i32, i32) {
    %c0_i32 = arith.constant 0 : i32
    %c0_i32_0 = arith.constant 0 : i32
    %c0_i32_1 = arith.constant 0 : i32
    return %arg0, %c0_i32, %c0_i32_0 : i32, i32, i32
  }
}

</mosaic_0001>

<llo_original>
// kernel: tpu_custom_call.1
$region0: #{tpu_custom_call.1}
  #allocation0 [shape = 'u32[]', space=smem, size = 0x4, offset = 0x4, fixed_abs, tag = 'smem constant byte address 0x4 - core index']
  #allocation1 [shape = 'u32[144,128]{1,0:T(1,128)}', space=vmem, size = 0x12000, scoped, tag = 'internal scratch']
  %s0 = inlined_call_operand.hbm [shape: f32[2,128,128], index: 0, kind: input, shape index: {}]
  %s1 = inlined_call_operand.hbm [shape: f32[2,128,128], index: 1, kind: input, shape index: {}]
  %s2 = inlined_call_operand.hbm [shape: f32[128,128], index: 2, kind: input, shape index: {}]
  %s3 = inlined_call_operand.vmem [shape: f32[1,128], index: 3, kind: input, shape index: {}]
  %s4 = inlined_call_operand.hbm [shape: f32[128,128], index: 4, kind: input, shape index: {}]
  %s5 = inlined_call_operand.vmem [shape: f32[1,128], index: 5, kind: input, shape index: {}]
  %s6 = inlined_call_operand.hbm [shape: f32[128,128], index: 6, kind: input, shape index: {}]
  %s7 = inlined_call_operand.vmem [shape: f32[1,128], index: 7, kind: input, shape index: {}]
  %s8 = inlined_call_operand.hbm [shape: f32[2,128,128], index: 8, kind: output, shape index: {}]
  %s9 = sld [smem:[#allocation0]]
  $region85: #{tpu_custom_call.1} parent=0
    _
  %s11 = ssub.s32 1, %s9
  %s12 = scalar_select 0, %s11, %s9
  $region1: #{tpu_custom_call.1} parent=0
    #allocation2 [shape = 'u8[131072]{0}', space=vmem, size = 0x20000, scoped, tag = 'input window, operand 0']
    #allocation3 [shape = 's32[2]{0}', space=sflag, size = 0x8, scoped, tag = 'scoped memory for tpu_custom_call.1']
    #allocation4 [shape = 's32[2]{0}', space=sflag, size = 0x8, scoped, tag = 'scoped memory for tpu_custom_call.1']
    #allocation5 [shape = 'u8[131072]{0}', space=vmem, size = 0x20000, scoped, tag = 'input window, operand 1']
    #allocation6 [shape = 's32[2]{0}', space=sflag, size = 0x8, scoped, tag = 'scoped memory for tpu_custom_call.1']
    #allocation7 [shape = 'u8[65536]{0}', space=vmem, size = 0x10000, scoped, tag = 'input window, operand 2, single buffered']
    #allocation8 [shape = 'u8[65536]{0}', space=vmem, size = 0x10000, scoped, tag = 'input window, operand 4, single buffered']
    #allocation9 [shape = 's32[1]{0}', space=sflag, size = 0x4, scoped, tag = 'scoped memory for tpu_custom_call.1']
    #allocation10 [shape = 'u8[65536]{0}', space=vmem, size = 0x10000, scoped, tag = 'input window, operand 6, single buffered']
    #allocation11 [shape = 'u8[131072]{0}', space=vmem, size = 0x20000, scoped, tag = 'output window, operand 0']
    %13 = vsyncpa [#allocation3], 0
    %s14 = scalar_lea.sflag [#allocation3], 1
    %15 = vsyncpa %s14, 0
    %16 = vsyncpa [#allocation6], 0
    %s17 = scalar_lea.sflag [#allocation6], 1
    %18 = vsyncpa %s17, 0
    %19 = vsyncpa [#allocation9], 0
    %20 = vsyncpa [#allocation4], 0
    %s21 = scalar_lea.sflag [#allocation4], 1
    %22 = vsyncpa %s21, 0
    loop: start=0, step=1, limit=4
    $region2: #{tpu_custom_call.1} parent=1 // loop_pre_header
      _
    $region3: #{tpu_custom_call.1} parent=1 // loop_header
      %s24 = sphi 0, %s28
      %p25 = scmp.ge.s32.totalorder %s24, 4
      %s34 = sphi 0, %s36
      %s37 = sphi 0, %s34
      %s38 = sphi 0, %s37
      %s54 = sphi 0, %s38
      %s60 = sphi 0, %s62
      %s63 = sphi 0, %s60
      %s64 = sphi 0, %s63
      %s80 = sphi 0, %s64
      %s84 = sphi 0, %s84
      %s86 = sphi 0, %s84
      %s87 = sphi 0, %s86
      %s101 = sphi 0, %s87
      %s105 = sphi 0, %s105
      %s107 = sphi 0, %s105
      %s108 = sphi 0, %s107
      %s122 = sphi 0, %s108
      %s126 = sphi 0, %s126
      %s128 = sphi 0, %s126
      %s129 = sphi 0, %s128
      %s143 = sphi 0, %s129
      %s147 = sphi 0, %s147
      %s149 = sphi 0, %s147
      %s150 = sphi 0, %s149
      %s164 = sphi 0, %s150
      %s168 = sphi 0, %s168
      %s170 = sphi 0, %s168
      %s171 = sphi 0, %s170
      %s185 = sphi 0, %s171
      %s189 = sphi 0, %s189
      %s191 = sphi 0, %s189
      %s192 = sphi 0, %s191
      %s206 = sphi 0, %s192
      %s212 = sphi 0, %s214
      %s215 = sphi 0, %s212
      %s216 = sphi 0, %s215
      %s232 = sphi 0, %s216
    $region4: #{tpu_custom_call.1} parent=1 // loop_header_branch
      %27 = sbr.rel (%p25) target = $region8
    $region5: #{tpu_custom_call.1} parent=1 // loop_body
      %s29 = ssub.s32 %s24, 1
      %s30 = ssub.s32 %s24, 2
      %s31 = sadd.s32 %s24, 1
      %s32 = ssub.s32 %s24, %s31
      %p33 = scmp.eq.s32.totalorder %s32, 0
      %s35 = sadd.s32 %s34, 1
      %s36 = scalar_select %p33, %s34, %s35
      %p39 = pneg %p33
      %p40 = scmp.eq.s32.totalorder %s24, 1
      %p41 = por %p39, %p40
      %p42 = scmp.ne.s32.totalorder %s34, %s37
      %p43 = scmp.eq.s32.totalorder %s24, 0
      %p44 = por %p42, %p43
      %p45 = scmp.ne.s32.totalorder %s34, %s37
      %p46 = scmp.eq.s32.totalorder %s29, 1
      %p47 = por %p45, %p46
      %p48 = scmp.ne.s32.totalorder %s37, %s38
      %p49 = scmp.eq.s32.totalorder %s29, 0
      %p50 = por %p48, %p49
      %p51 = scmp.ne.s32.totalorder %s37, %s38
      %p52 = scmp.eq.s32.totalorder %s30, 1
      %p53 = por %p51, %p52
      %p55 = scmp.ne.s32.totalorder %s38, %s54
      %p56 = scmp.eq.s32.totalorder %s30, 0
      %p57 = por %p55, %p56
      %s58 = ssub.s32 %s24, %s31
      %p59 = scmp.eq.s32.totalorder %s58, 0
      %s61 = sadd.s32 %s60, 1
      %s62 = scalar_select %p59, %s60, %s61
      %p65 = pneg %p59
      %p66 = scmp.eq.s32.totalorder %s24, 1
      %p67 = por %p65, %p66
      %p68 = scmp.ne.s32.totalorder %s60, %s63
      %p69 = scmp.eq.s32.totalorder %s24, 0
      %p70 = por %p68, %p69
      %p71 = scmp.ne.s32.totalorder %s60, %s63
      %p72 = scmp.eq.s32.totalorder %s29, 1
      %p73 = por %p71, %p72
      %p74 = scmp.ne.s32.totalorder %s63, %s64
      %p75 = scmp.eq.s32.totalorder %s29, 0
      %p76 = por %p74, %p75
      %p77 = scmp.ne.s32.totalorder %s63, %s64
      %p78 = scmp.eq.s32.totalorder %s30, 1
      %p79 = por %p77, %p78
      %p81 = scmp.ne.s32.totalorder %s64, %s80
      %p82 = scmp.eq.s32.totalorder %s30, 0
      %p83 = por %p81, %p82
      %s85 = sadd.s32 %s84, 1
      %p88 = scmp.eq.s32.totalorder %s24, 1
      %p89 = scmp.ne.s32.totalorder %s84, %s86
      %p90 = scmp.eq.s32.totalorder %s24, 0
      %p91 = por %p89, %p90
      %p92 = scmp.ne.s32.totalorder %s84, %s86
      %p93 = scmp.eq.s32.totalorder %s29, 1
      %p94 = por %p92, %p93
      %p95 = scmp.ne.s32.totalorder %s86, %s87
      %p96 = scmp.eq.s32.totalorder %s29, 0
      %p97 = por %p95, %p96
      %p98 = scmp.ne.s32.totalorder %s86, %s87
      %p99 = scmp.eq.s32.totalorder %s30, 1
      %p100 = por %p98, %p99
      %p102 = scmp.ne.s32.totalorder %s87, %s101
      %p103 = scmp.eq.s32.totalorder %s30, 0
      %p104 = por %p102, %p103
      %s106 = sadd.s32 %s105, 1
      %p109 = scmp.eq.s32.totalorder %s24, 1
      %p110 = scmp.ne.s32.totalorder %s105, %s107
      %p111 = scmp.eq.s32.totalorder %s24, 0
      %p112 = por %p110, %p111
      %p113 = scmp.ne.s32.totalorder %s105, %s107
      %p114 = scmp.eq.s32.totalorder %s29, 1
      %p115 = por %p113, %p114
      %p116 = scmp.ne.s32.totalorder %s107, %s108
      %p117 = scmp.eq.s32.totalorder %s29, 0
      %p118 = por %p116, %p117
      %p119 = scmp.ne.s32.totalorder %s107, %s108
      %p120 = scmp.eq.s32.totalorder %s30, 1
      %p121 = por %p119, %p120
      %p123 = scmp.ne.s32.totalorder %s108, %s122
      %p124 = scmp.eq.s32.totalorder %s30, 0
      %p125 = por %p123, %p124
      %s127 = sadd.s32 %s126, 1
      %p130 = scmp.eq.s32.totalorder %s24, 1
      %p131 = scmp.ne.s32.totalorder %s126, %s128
      %p132 = scmp.eq.s32.totalorder %s24, 0
      %p133 = por %p131, %p132
      %p134 = scmp.ne.s32.totalorder %s126, %s128
      %p135 = scmp.eq.s32.totalorder %s29, 1
      %p136 = por %p134, %p135
      %p137 = scmp.ne.s32.totalorder %s128, %s129
      %p138 = scmp.eq.s32.totalorder %s29, 0
      %p139 = por %p137, %p138
      %p140 = scmp.ne.s32.totalorder %s128, %s129
      %p141 = scmp.eq.s32.totalorder %s30, 1
      %p142 = por %p140, %p141
      %p144 = scmp.ne.s32.totalorder %s129, %s143
      %p145 = scmp.eq.s32.totalorder %s30, 0
      %p146 = por %p144, %p145
      %s148 = sadd.s32 %s147, 1
      %p151 = scmp.eq.s32.totalorder %s24, 1
      %p152 = scmp.ne.s32.totalorder %s147, %s149
      %p153 = scmp.eq.s32.totalorder %s24, 0
      %p154 = por %p152, %p153
      %p155 = scmp.ne.s32.totalorder %s147, %s149
      %p156 = scmp.eq.s32.totalorder %s29, 1
      %p157 = por %p155, %p156
      %p158 = scmp.ne.s32.totalorder %s149, %s150
      %p159 = scmp.eq.s32.totalorder %s29, 0
      %p160 = por %p158, %p159
      %p161 = scmp.ne.s32.totalorder %s149, %s150
      %p162 = scmp.eq.s32.totalorder %s30, 1
      %p163 = por %p161, %p162
      %p165 = scmp.ne.s32.totalorder %s150, %s164
      %p166 = scmp.eq.s32.totalorder %s30, 0
      %p167 = por %p165, %p166
      %s169 = sadd.s32 %s168, 1
      %p172 = scmp.eq.s32.totalorder %s24, 1
      %p173 = scmp.ne.s32.totalorder %s168, %s170
      %p174 = scmp.eq.s32.totalorder %s24, 0
      %p175 = por %p173, %p174
      %p176 = scmp.ne.s32.totalorder %s168, %s170
      %p177 = scmp.eq.s32.totalorder %s29, 1
      %p178 = por %p176, %p177
      %p179 = scmp.ne.s32.totalorder %s170, %s171
      %p180 = scmp.eq.s32.totalorder %s29, 0
      %p181 = por %p179, %p180
      %p182 = scmp.ne.s32.totalorder %s170, %s171
      %p183 = scmp.eq.s32.totalorder %s30, 1
      %p184 = por %p182, %p183
      %p186 = scmp.ne.s32.totalorder %s171, %s185
      %p187 = scmp.eq.s32.totalorder %s30, 0
      %p188 = por %p186, %p187
      %s190 = sadd.s32 %s189, 1
      %p193 = scmp.eq.s32.totalorder %s24, 1
      %p194 = scmp.ne.s32.totalorder %s189, %s191
      %p195 = scmp.eq.s32.totalorder %s24, 0
      %p196 = por %p194, %p195
      %p197 = scmp.ne.s32.totalorder %s189, %s191
      %p198 = scmp.eq.s32.totalorder %s29, 1
      %p199 = por %p197, %p198
      %p200 = scmp.ne.s32.totalorder %s191, %s192
      %p201 = scmp.eq.s32.totalorder %s29, 0
      %p202 = por %p200, %p201
      %p203 = scmp.ne.s32.totalorder %s191, %s192
      %p204 = scmp.eq.s32.totalorder %s30, 1
      %p205 = por %p203, %p204
      %p207 = scmp.ne.s32.totalorder %s192, %s206
      %p208 = scmp.eq.s32.totalorder %s30, 0
      %p209 = por %p207, %p208
      %s210 = ssub.s32 %s24, %s31
      %p211 = scmp.eq.s32.totalorder %s210, 0
      %s213 = sadd.s32 %s212, 1
      %s214 = scalar_select %p211, %s212, %s213
      %p217 = pneg %p211
      %p218 = scmp.eq.s32.totalorder %s24, 1
      %p219 = por %p217, %p218
      %p220 = scmp.ne.s32.totalorder %s212, %s215
      %p221 = scmp.eq.s32.totalorder %s24, 0
      %p222 = por %p220, %p221
      %p223 = scmp.ne.s32.totalorder %s212, %s215
      %p224 = scmp.eq.s32.totalorder %s29, 1
      %p225 = por %p223, %p224
      %p226 = scmp.ne.s32.totalorder %s215, %s216
      %p227 = scmp.eq.s32.totalorder %s29, 0
      %p228 = por %p226, %p227
      %p229 = scmp.ne.s32.totalorder %s215, %s216
      %p230 = scmp.eq.s32.totalorder %s30, 1
      %p231 = por %p229, %p230
      %p233 = scmp.ne.s32.totalorder %s216, %s232
      %p234 = scmp.eq.s32.totalorder %s30, 0
      %p235 = por %p233, %p234
      %p236 = scmp.le.s32.totalorder 1, %s24
      %p237 = scmp.lt.s32.totalorder %s24, 3
      %p238 = pnand %p236, %p237
      %p239 = pneg %p238
      // Predicated region
      $region9: #{tpu_custom_call.1} parent=5 // pred_check
        _
      $region10: #{tpu_custom_call.1} parent=5 // pred_check_branch
        %241 = sbr.rel (%p238) target = $region12
      $region11: #{tpu_custom_call.1} parent=5 // pred_region
        %s242 = ssub.s32 %s24, 1
        // Predicated region
        $region13: #{tpu_custom_call.1} parent=11 // pred_check
          %p243 = pneg %p97
        $region14: #{tpu_custom_call.1} parent=11 // pred_check_branch
          %245 = sbr.rel (%p243) target = $region16
        $region15: #{tpu_custom_call.1} parent=11 // pred_region
          %s247 = ssub.s32 2048, 2048
          %248 = vsyncadd [#allocation6], %s247
          %s249 = sshll.u32 [#allocation7], 4
          %s250 = int_to_ptr.vmem [resolvable:$true] %s249
          %255 = dma.hbm_to_vmem [thread:$0]  %s2, 2048, %s250, [#allocation6], 128, 128, 8
        $region16: #{tpu_custom_call.1} parent=11 // pred_fallthru
          _
        // Predicated region
        $region17: #{tpu_custom_call.1} parent=11 // pred_check
          %p256 = pneg %p118
        $region18: #{tpu_custom_call.1} parent=11 // pred_check_branch
          %258 = sbr.rel (%p256) target = $region20
        $region19: #{tpu_custom_call.1} parent=11 // pred_region
          _
        $region20: #{tpu_custom_call.1} parent=11 // pred_fallthru
          _
        // Predicated region
        $region21: #{tpu_custom_call.1} parent=11 // pred_check
          %p259 = pneg %p139
        $region22: #{tpu_custom_call.1} parent=11 // pred_check_branch
          %261 = sbr.rel (%p259) target = $region24
        $region23: #{tpu_custom_call.1} parent=11 // pred_region
          %s263 = ssub.s32 2048, 2048
          %264 = vsyncadd [#allocation9], %s263
          %s265 = sshll.u32 [#allocation8], 4
          %s266 = int_to_ptr.vmem [resolvable:$true] %s265
          %271 = dma.hbm_to_vmem [thread:$0]  %s4, 2048, %s266, [#allocation9], 128, 128, 8
        $region24: #{tpu_custom_call.1} parent=11 // pred_fallthru
          _
        // Predicated region
        $region25: #{tpu_custom_call.1} parent=11 // pred_check
          %p272 = pneg %p160
        $region26: #{tpu_custom_call.1} parent=11 // pred_check_branch
          %274 = sbr.rel (%p272) target = $region28
        $region27: #{tpu_custom_call.1} parent=11 // pred_region
          _
        $region28: #{tpu_custom_call.1} parent=11 // pred_fallthru
          _
        // Predicated region
        $region29: #{tpu_custom_call.1} parent=11 // pred_check
          %p275 = pneg %p181
        $region30: #{tpu_custom_call.1} parent=11 // pred_check_branch
          %277 = sbr.rel (%p275) target = $region32
        $region31: #{tpu_custom_call.1} parent=11 // pred_region
          %s279 = ssub.s32 2048, 2048
          %280 = vsyncadd [#allocation9], %s279
          %s281 = sshll.u32 [#allocation10], 4
          %s282 = int_to_ptr.vmem [resolvable:$true] %s281
          %287 = dma.hbm_to_vmem [thread:$0]  %s6, 2048, %s282, [#allocation9], 128, 128, 8
        $region32: #{tpu_custom_call.1} parent=11 // pred_fallthru
          _
        // Predicated region
        $region33: #{tpu_custom_call.1} parent=11 // pred_check
          %p288 = pneg %p202
        $region34: #{tpu_custom_call.1} parent=11 // pred_check_branch
          %290 = sbr.rel (%p288) target = $region36
        $region35: #{tpu_custom_call.1} parent=11 // pred_region
          _
        $region36: #{tpu_custom_call.1} parent=11 // pred_fallthru
          _
      $region12: #{tpu_custom_call.1} parent=5 // pred_fallthru
        _
      %p291 = scmp.lt.s32.totalorder %s24, 2
      // Predicated region
      $region37: #{tpu_custom_call.1} parent=5 // pred_check
        %p292 = pneg %p291
      $region38: #{tpu_custom_call.1} parent=5 // pred_check_branch
        %294 = sbr.rel (%p292) target = $region40
      $region39: #{tpu_custom_call.1} parent=5 // pred_region
        // Predicated region
        $region41: #{tpu_custom_call.1} parent=39 // pred_check
          %p295 = pneg %p44
        $region42: #{tpu_custom_call.1} parent=39 // pred_check_branch
          %297 = sbr.rel (%p295) target = $region44
        $region43: #{tpu_custom_call.1} parent=39 // pred_region
          %s298 = sand.u32 %s34, 1
          %s299 = scalar_lea.sflag [#allocation3], %s298
          %s300 = sand.u32 %s34, 1
          %s301 = smul.addr %s300, 128
          %s302 = scalar_lea.vmem [#allocation2], %s301
          %s304 = ssub.s32 2048, 2048
          %305 = vsyncadd %s299, %s304
          %s306 = smul.addr %s24, 16
          %s307 = smul.addr %s306, 128
          %s308 = scalar_lea.hbm %s0, %s307
          %s309 = sshll.u32 %s302, 4
          %s310 = int_to_ptr.vmem [resolvable:$true] %s309
          %315 = dma.hbm_to_vmem [thread:$0]  %s308, 2048, %s310, %s299, 128, 128, 8
        $region44: #{tpu_custom_call.1} parent=39 // pred_fallthru
          _
        // Predicated region
        $region45: #{tpu_custom_call.1} parent=39 // pred_check
          %p316 = pneg %p70
        $region46: #{tpu_custom_call.1} parent=39 // pred_check_branch
          %318 = sbr.rel (%p316) target = $region48
        $region47: #{tpu_custom_call.1} parent=39 // pred_region
          %s319 = sand.u32 %s24, 1
          %s320 = scalar_lea.sflag [#allocation6], %s319
          %s321 = sand.u32 %s60, 1
          %s322 = smul.addr %s321, 128
          %s323 = scalar_lea.vmem [#allocation5], %s322
          %s325 = ssub.s32 2048, 2048
          %326 = vsyncadd %s320, %s325
          %s327 = smul.addr %s24, 16
          %s328 = smul.addr %s327, 128
          %s329 = scalar_lea.hbm %s1, %s328
          %s330 = sshll.u32 %s323, 4
          %s331 = int_to_ptr.vmem [resolvable:$true] %s330
          %336 = dma.hbm_to_vmem [thread:$0]  %s329, 2048, %s331, %s320, 128, 128, 8
        $region48: #{tpu_custom_call.1} parent=39 // pred_fallthru
          _
      $region40: #{tpu_custom_call.1} parent=5 // pred_fallthru
        _
      %p337 = scmp.le.s32.totalorder 1, %s24
      %p338 = scmp.lt.s32.totalorder %s24, 3
      %p339 = pnand %p337, %p338
      %p340 = pneg %p339
      // Predicated region
      $region49: #{tpu_custom_call.1} parent=5 // pred_check
        _
      $region50: #{tpu_custom_call.1} parent=5 // pred_check_branch
        %342 = sbr.rel (%p339) target = $region52
      $region51: #{tpu_custom_call.1} parent=5 // pred_region
        %s343 = ssub.s32 %s24, 1
        %s344 = sand.u32 %s37, 1
        %s345 = scalar_lea.sflag [#allocation3], %s344
        %s346 = sand.u32 %s37, 1
        %s347 = smul.addr %s346, 128
        %s348 = scalar_lea.vmem [#allocation2], %s347
        // Predicated region
        $region53: #{tpu_custom_call.1} parent=51 // pred_check
          %p349 = pneg %p50
        $region54: #{tpu_custom_call.1} parent=51 // pred_check_branch
          %351 = sbr.rel (%p349) target = $region56
        $region55: #{tpu_custom_call.1} parent=51 // pred_region
          %352 = dma.done %s345, 2048
        $region56: #{tpu_custom_call.1} parent=51 // pred_fallthru
          _
        %s353 = sand.u32 %s29, 1
        %s354 = scalar_lea.sflag [#allocation6], %s353
        %s355 = sand.u32 %s63, 1
        %s356 = smul.addr %s355, 128
        %s357 = scalar_lea.vmem [#allocation5], %s356
        // Predicated region
        $region57: #{tpu_custom_call.1} parent=51 // pred_check
          %p358 = pneg %p76
        $region58: #{tpu_custom_call.1} parent=51 // pred_check_branch
          %360 = sbr.rel (%p358) target = $region60
        $region59: #{tpu_custom_call.1} parent=51 // pred_region
          %361 = dma.done %s354, 2048
        $region60: #{tpu_custom_call.1} parent=51 // pred_fallthru
          _
        // Predicated region
        $region61: #{tpu_custom_call.1} parent=51 // pred_check
          %p362 = pneg %p97
        $region62: #{tpu_custom_call.1} parent=51 // pred_check_branch
          %364 = sbr.rel (%p362) target = $region64
        $region63: #{tpu_custom_call.1} parent=51 // pred_region
          %365 = dma.done [#allocation6], 2048
        $region64: #{tpu_custom_call.1} parent=51 // pred_fallthru
          _
        // Predicated region
        $region65: #{tpu_custom_call.1} parent=51 // pred_check
          %p366 = pneg %p139
        $region66: #{tpu_custom_call.1} parent=51 // pred_check_branch
          %368 = sbr.rel (%p366) target = $region68
        $region67: #{tpu_custom_call.1} parent=51 // pred_region
          %369 = dma.done [#allocation9], 2048
        $region68: #{tpu_custom_call.1} parent=51 // pred_fallthru
          _
        // Predicated region
        $region69: #{tpu_custom_call.1} parent=51 // pred_check
          %p370 = pneg %p181
        $region70: #{tpu_custom_call.1} parent=51 // pred_check_branch
          %372 = sbr.rel (%p370) target = $region72
        $region71: #{tpu_custom_call.1} parent=51 // pred_region
          %373 = dma.done [#allocation9], 2048
        $region72: #{tpu_custom_call.1} parent=51 // pred_fallthru
          _
        %s374 = sand.u32 %s37, 1
        %s375 = scalar_lea.sflag [#allocation3], %s374
        %s376 = sand.u32 %s37, 1
        %s377 = smul.addr %s376, 128
        %s378 = scalar_lea.vmem [#allocation2], %s377
        %p379 = pneg %p50
        %p380 = pneg %p47
        %s381 = sand.u32 %s29, 1
        %s382 = scalar_lea.sflag [#allocation6], %s381
        %s383 = sand.u32 %s63, 1
        %s384 = smul.addr %s383, 128
        %s385 = scalar_lea.vmem [#allocation5], %s384
        %p386 = pneg %p76
        %p387 = pneg %p73
        %p388 = pneg %p97
        %p389 = pneg %p94
        %p390 = pneg %p118
        %p391 = pneg %p115
        %p392 = pneg %p139
        %p393 = pneg %p136
        %p394 = pneg %p160
        %p395 = pneg %p157
        %p396 = pneg %p181
        %p397 = pneg %p178
        %p398 = pneg %p202
        %p399 = pneg %p199
        %p400 = pneg %p228
        %p401 = pneg %p225
        %s402 = sand.u32 %s215, 1
        %s403 = scalar_lea.sflag [#allocation4], %s402
        %s404 = sand.u32 %s215, 1
        %s405 = smul.addr %s404, 128
        %s406 = scalar_lea.vmem [#allocation11], %s405
        %v407 = vld [vmem:[%s348] sm:$0xff]
        %v408 = vld [vmem:[%s348 + $0x8] sm:$0xff]
        %v409 = vld [vmem:[%s348 + $0x10] sm:$0xff]
        %v410 = vld [vmem:[%s348 + $0x18] sm:$0xff]
        %v411 = vld [vmem:[%s348 + $0x20] sm:$0xff]
        %v412 = vld [vmem:[%s348 + $0x28] sm:$0xff]
        %v413 = vld [vmem:[%s348 + $0x30] sm:$0xff]
        %v414 = vld [vmem:[%s348 + $0x38] sm:$0xff]
        %v415 = vld [vmem:[%s348 + $0x40] sm:$0xff]
        %v416 = vld [vmem:[%s348 + $0x48] sm:$0xff]
        %v417 = vld [vmem:[%s348 + $0x50] sm:$0xff]
        %v418 = vld [vmem:[%s348 + $0x58] sm:$0xff]
        %v419 = vld [vmem:[%s348 + $0x60] sm:$0xff]
        %v420 = vld [vmem:[%s348 + $0x68] sm:$0xff]
        %v421 = vld [vmem:[%s348 + $0x70] sm:$0xff]
        %v422 = vld [vmem:[%s348 + $0x78] sm:$0xff]
        %v423 = vld [vmem:[%s357] sm:$0xff]
        %v424 = vld [vmem:[%s357 + $0x8] sm:$0xff]
        %v425 = vld [vmem:[%s357 + $0x10] sm:$0xff]
        %v426 = vld [vmem:[%s357 + $0x18] sm:$0xff]
        %v427 = vld [vmem:[%s357 + $0x20] sm:$0xff]
        %v428 = vld [vmem:[%s357 + $0x28] sm:$0xff]
        %v429 = vld [vmem:[%s357 + $0x30] sm:$0xff]
        %v430 = vld [vmem:[%s357 + $0x38] sm:$0xff]
        %v431 = vld [vmem:[%s357 + $0x40] sm:$0xff]
        %v432 = vld [vmem:[%s357 + $0x48] sm:$0xff]
        %v433 = vld [vmem:[%s357 + $0x50] sm:$0xff]
        %v434 = vld [vmem:[%s357 + $0x58] sm:$0xff]
        %v435 = vld [vmem:[%s357 + $0x60] sm:$0xff]
        %v436 = vld [vmem:[%s357 + $0x68] sm:$0xff]
        %v437 = vld [vmem:[%s357 + $0x70] sm:$0xff]
        %v438 = vld [vmem:[%s357 + $0x78] sm:$0xff]
        %v439 = vld [vmem:[#allocation7] sm:$0xff]
        %v440 = vld [vmem:[#allocation7 + $0x8] sm:$0xff]
        %v441 = vld [vmem:[#allocation7 + $0x10] sm:$0xff]
        %v442 = vld [vmem:[#allocation7 + $0x18] sm:$0xff]
        %v443 = vld [vmem:[#allocation7 + $0x20] sm:$0xff]
        %v444 = vld [vmem:[#allocation7 + $0x28] sm:$0xff]
        %v445 = vld [vmem:[#allocation7 + $0x30] sm:$0xff]
        %v446 = vld [vmem:[#allocation7 + $0x38] sm:$0xff]
        %v447 = vld [vmem:[#allocation7 + $0x40] sm:$0xff]
        %v448 = vld [vmem:[#allocation7 + $0x48] sm:$0xff]
        %v449 = vld [vmem:[#allocation7 + $0x50] sm:$0xff]
        %v450 = vld [vmem:[#allocation7 + $0x58] sm:$0xff]
        %v451 = vld [vmem:[#allocation7 + $0x60] sm:$0xff]
        %v452 = vld [vmem:[#allocation7 + $0x68] sm:$0xff]
        %v453 = vld [vmem:[#allocation7 + $0x70] sm:$0xff]
        %v454 = vld [vmem:[#allocation7 + $0x78] sm:$0xff]
        %455 = vmatprep.subr.mxu0 0.0
        %456 = vmatpush1.msra.mxu0 %v454
        %457 = vmatprep.subr.mxu0 0.0
        %458 = vmatpush1.msra.mxu0 %v453
        %459 = vmatprep.subr.mxu0 0.0
        %460 = vmatpush1.msra.mxu0 %v452
        %461 = vmatprep.subr.mxu0 0.0
        %462 = vmatpush1.msra.mxu0 %v451
        %463 = vmatprep.subr.mxu0 0.0
        %464 = vmatpush1.msra.mxu0 %v450
        %465 = vmatprep.subr.mxu0 0.0
        %466 = vmatpush1.msra.mxu0 %v449
        %467 = vmatprep.subr.mxu0 0.0
        %468 = vmatpush1.msra.mxu0 %v448
        %469 = vmatprep.subr.mxu0 0.0
        %470 = vmatpush1.msra.mxu0 %v447
        %471 = vmatprep.subr.mxu0 0.0
        %472 = vmatpush1.msra.mxu0 %v446
        %473 = vmatprep.subr.mxu0 0.0
        %474 = vmatpush1.msra.mxu0 %v445
        %475 = vmatprep.subr.mxu0 0.0
        %476 = vmatpush1.msra.mxu0 %v444
        %477 = vmatprep.subr.mxu0 0.0
        %478 = vmatpush1.msra.mxu0 %v443
        %479 = vmatprep.subr.mxu0 0.0
        %480 = vmatpush1.msra.mxu0 %v442
        %481 = vmatprep.subr.mxu0 0.0
        %482 = vmatpush1.msra.mxu0 %v441
        %483 = vmatprep.subr.mxu0 0.0
        %484 = vmatpush1.msra.mxu0 %v440
        %485 = vmatprep.subr.mxu0 0.0
        %486 = vmatpush1.msra.mxu0 %v439
        %487 = vmatprep.subr.mxu0 0.0
        %488 = vmatpush2.msra.mxu0 0.0
        %489 = vmatprep.subr.mxu0 0.0
        %490 = vmatpush2.msra.mxu0 0.0
        %491 = vmatprep.subr.mxu0 0.0
        %492 = vmatpush2.msra.mxu0 0.0
        %493 = vmatprep.subr.mxu0 0.0
        %494 = vmatpush2.msra.mxu0 0.0
        %495 = vmatprep.subr.mxu0 0.0
        %496 = vmatpush2.msra.mxu0 0.0
        %497 = vmatprep.subr.mxu0 0.0
        %498 = vmatpush2.msra.mxu0 0.0
        %499 = vmatprep.subr.mxu0 0.0
        %500 = vmatpush2.msra.mxu0 0.0
        %501 = vmatprep.subr.mxu0 0.0
        %502 = vmatpush2.msra.mxu0 0.0
        %503 = vmatprep.subr.mxu0 0.0
        %504 = vmatpush2.msra.mxu0 0.0
        %505 = vmatprep.subr.mxu0 0.0
        %506 = vmatpush2.msra.mxu0 0.0
        %507 = vmatprep.subr.mxu0 0.0
        %508 = vmatpush2.msra.mxu0 0.0
        %509 = vmatprep.subr.mxu0 0.0
        %510 = vmatpush2.msra.mxu0 0.0
        %511 = vmatprep.subr.mxu0 0.0
        %512 = vmatpush2.msra.mxu0 0.0
        %513 = vmatprep.subr.mxu0 0.0
        %514 = vmatpush2.msra.mxu0 0.0
        %515 = vmatprep.subr.mxu0 0.0
        %516 = vmatpush2.msra.mxu0 0.0
        %517 = vmatprep.subr.mxu0 0.0
        %518 = vmatpush2.msra.mxu0 0.0
        %519 = vmatprep.mubr.f32.mxu0 0.0
        %520 = vmatmul.mubr.f32.gmra.mxu0 %v423
        %v521 = vpop.f32.mrf.mxu0
        %v522 = vadd.f32 0.0, %v521
        %v523 = vpop.f32.mrf.mxu0
        %524 = vmatprep.mubr.f32.mxu0 0.0
        %525 = vmatmul.mubr.f32.gmra.mxu0 %v424
        %v526 = vpop.f32.mrf.mxu0
        %v527 = vadd.f32 0.0, %v526
        %v528 = vpop.f32.mrf.mxu0
        %529 = vmatprep.mubr.f32.mxu0 0.0
        %530 = vmatmul.mubr.f32.gmra.mxu0 %v425
        %v531 = vpop.f32.mrf.mxu0
        %v532 = vadd.f32 0.0, %v531
        %v533 = vpop.f32.mrf.mxu0
        %534 = vmatprep.mubr.f32.mxu0 0.0
        %535 = vmatmul.mubr.f32.gmra.mxu0 %v426
        %v536 = vpop.f32.mrf.mxu0
        %v537 = vadd.f32 0.0, %v536
        %v538 = vpop.f32.mrf.mxu0
        %539 = vmatprep.mubr.f32.mxu0 0.0
        %540 = vmatmul.mubr.f32.gmra.mxu0 %v427
        %v541 = vpop.f32.mrf.mxu0
        %v542 = vadd.f32 0.0, %v541
        %v543 = vpop.f32.mrf.mxu0
        %544 = vmatprep.mubr.f32.mxu0 0.0
        %545 = vmatmul.mubr.f32.gmra.mxu0 %v428
        %v546 = vpop.f32.mrf.mxu0
        %v547 = vadd.f32 0.0, %v546
        %v548 = vpop.f32.mrf.mxu0
        %549 = vmatprep.mubr.f32.mxu0 0.0
        %550 = vmatmul.mubr.f32.gmra.mxu0 %v429
        %v551 = vpop.f32.mrf.mxu0
        %v552 = vadd.f32 0.0, %v551
        %v553 = vpop.f32.mrf.mxu0
        %554 = vmatprep.mubr.f32.mxu0 0.0
        %555 = vmatmul.mubr.f32.gmra.mxu0 %v430
        %v556 = vpop.f32.mrf.mxu0
        %v557 = vadd.f32 0.0, %v556
        %v558 = vpop.f32.mrf.mxu0
        %559 = vmatprep.mubr.f32.mxu0 0.0
        %560 = vmatmul.mubr.f32.gmra.mxu0 %v431
        %v561 = vpop.f32.mrf.mxu0
        %v562 = vadd.f32 0.0, %v561
        %v563 = vpop.f32.mrf.mxu0
        %564 = vmatprep.mubr.f32.mxu0 0.0
        %565 = vmatmul.mubr.f32.gmra.mxu0 %v432
        %v566 = vpop.f32.mrf.mxu0
        %v567 = vadd.f32 0.0, %v566
        %v568 = vpop.f32.mrf.mxu0
        %569 = vmatprep.mubr.f32.mxu0 0.0
        %570 = vmatmul.mubr.f32.gmra.mxu0 %v433
        %v571 = vpop.f32.mrf.mxu0
        %v572 = vadd.f32 0.0, %v571
        %v573 = vpop.f32.mrf.mxu0
        %574 = vmatprep.mubr.f32.mxu0 0.0
        %575 = vmatmul.mubr.f32.gmra.mxu0 %v434
        %v576 = vpop.f32.mrf.mxu0
        %v577 = vadd.f32 0.0, %v576
        %v578 = vpop.f32.mrf.mxu0
        %579 = vmatprep.mubr.f32.mxu0 0.0
        %580 = vmatmul.mubr.f32.gmra.mxu0 %v435
        %v581 = vpop.f32.mrf.mxu0
        %v582 = vadd.f32 0.0, %v581
        %v583 = vpop.f32.mrf.mxu0
        %584 = vmatprep.mubr.f32.mxu0 0.0
        %585 = vmatmul.mubr.f32.gmra.mxu0 %v436
        %v586 = vpop.f32.mrf.mxu0
        %v587 = vadd.f32 0.0, %v586
        %v588 = vpop.f32.mrf.mxu0
        %589 = vmatprep.mubr.f32.mxu0 0.0
        %590 = vmatmul.mubr.f32.gmra.mxu0 %v437
        %v591 = vpop.f32.mrf.mxu0
        %v592 = vadd.f32 0.0, %v591
        %v593 = vpop.f32.mrf.mxu0
        %594 = vmatprep.mubr.f32.mxu0 0.0
        %595 = vmatmul.mubr.f32.gmra.mxu0 %v438
        %v596 = vpop.f32.mrf.mxu0
        %v597 = vadd.f32 0.0, %v596
        %v598 = vpop.f32.mrf.mxu0
        %599 = vdwg.mxu0
        %v600 = vld [vmem:[%s3] sm:$0x1]
        %v602 = vlaneseq
        %v603 = vshrl.u32 %v602, 7
        %v604 = vsub.s32 0, %v603
        %v605 = vrot.slane %v600, %v604
        %607 = vmatprep.subr.mxu0 0.0
        %608 = vmatpush1.msra.mxu0 %v597
        %609 = vmatprep.subr.mxu0 0.0
        %610 = vmatpush1.msra.mxu0 %v592
        %611 = vmatprep.subr.mxu0 0.0
        %612 = vmatpush1.msra.mxu0 %v587
        %613 = vmatprep.subr.mxu0 0.0
        %614 = vmatpush1.msra.mxu0 %v582
        %615 = vmatprep.subr.mxu0 0.0
        %616 = vmatpush1.msra.mxu0 %v577
        %617 = vmatprep.subr.mxu0 0.0
        %618 = vmatpush1.msra.mxu0 %v572
        %619 = vmatprep.subr.mxu0 0.0
        %620 = vmatpush1.msra.mxu0 %v567
        %621 = vmatprep.subr.mxu0 0.0
        %622 = vmatpush1.msra.mxu0 %v562
        %623 = vmatprep.subr.mxu0 0.0
        %624 = vmatpush1.msra.mxu0 %v557
        %625 = vmatprep.subr.mxu0 0.0
        %626 = vmatpush1.msra.mxu0 %v552
        %627 = vmatprep.subr.mxu0 0.0
        %628 = vmatpush1.msra.mxu0 %v547
        %629 = vmatprep.subr.mxu0 0.0
        %630 = vmatpush1.msra.mxu0 %v542
        %631 = vmatprep.subr.mxu0 0.0
        %632 = vmatpush1.msra.mxu0 %v537
        %633 = vmatprep.subr.mxu0 0.0
        %634 = vmatpush1.msra.mxu0 %v532
        %635 = vmatprep.subr.mxu0 0.0
        %636 = vmatpush1.msra.mxu0 %v527
        %637 = vmatprep.subr.mxu0 0.0
        %638 = vmatpush1.msra.mxu0 %v522
        %639 = vmatprep.subr.mxu0 0.0
        %640 = vmatpush2.msra.mxu0 0.0
        %641 = vmatprep.subr.mxu0 0.0
        %642 = vmatpush2.msra.mxu0 0.0
        %643 = vmatprep.subr.mxu0 0.0
        %644 = vmatpush2.msra.mxu0 0.0
        %645 = vmatprep.subr.mxu0 0.0
        %646 = vmatpush2.msra.mxu0 0.0
        %647 = vmatprep.subr.mxu0 0.0
        %648 = vmatpush2.msra.mxu0 0.0
        %649 = vmatprep.subr.mxu0 0.0
        %650 = vmatpush2.msra.mxu0 0.0
        %651 = vmatprep.subr.mxu0 0.0
        %652 = vmatpush2.msra.mxu0 0.0
        %653 = vmatprep.subr.mxu0 0.0
        %654 = vmatpush2.msra.mxu0 0.0
        %655 = vmatprep.subr.mxu0 0.0
        %656 = vmatpush2.msra.mxu0 0.0
        %657 = vmatprep.subr.mxu0 0.0
        %658 = vmatpush2.msra.mxu0 0.0
        %659 = vmatprep.subr.mxu0 0.0
        %660 = vmatpush2.msra.mxu0 0.0
        %661 = vmatprep.subr.mxu0 0.0
        %662 = vmatpush2.msra.mxu0 0.0
        %663 = vmatprep.subr.mxu0 0.0
        %664 = vmatpush2.msra.mxu0 0.0
        %665 = vmatprep.subr.mxu0 0.0
        %666 = vmatpush2.msra.mxu0 0.0
        %667 = vmatprep.subr.mxu0 0.0
        %668 = vmatpush2.msra.mxu0 0.0
        %669 = vmatprep.subr.mxu0 0.0
        %670 = vmatpush2.msra.mxu0 0.0
        %671 = vmatprep.mubr.f32.mxu0 0.0
        %672 = vmatmul.mubr.f32.gmra.mxu0 %v407
        %v673 = vpop.f32.mrf.mxu0
        %v674 = vadd.f32 %v605, %v673
        %v675 = vpop.f32.mrf.mxu0
        %676 = vmatprep.mubr.f32.mxu0 0.0
        %677 = vmatmul.mubr.f32.gmra.mxu0 %v408
        %v678 = vpop.f32.mrf.mxu0
        %v679 = vadd.f32 %v605, %v678
        %v680 = vpop.f32.mrf.mxu0
        %681 = vmatprep.mubr.f32.mxu0 0.0
        %682 = vmatmul.mubr.f32.gmra.mxu0 %v409
        %v683 = vpop.f32.mrf.mxu0
        %v684 = vadd.f32 %v605, %v683
        %v685 = vpop.f32.mrf.mxu0
        %686 = vmatprep.mubr.f32.mxu0 0.0
        %687 = vmatmul.mubr.f32.gmra.mxu0 %v410
        %v688 = vpop.f32.mrf.mxu0
        %v689 = vadd.f32 %v605, %v688
        %v690 = vpop.f32.mrf.mxu0
        %691 = vmatprep.mubr.f32.mxu0 0.0
        %692 = vmatmul.mubr.f32.gmra.mxu0 %v411
        %v693 = vpop.f32.mrf.mxu0
        %v694 = vadd.f32 %v605, %v693
        %v695 = vpop.f32.mrf.mxu0
        %696 = vmatprep.mubr.f32.mxu0 0.0
        %697 = vmatmul.mubr.f32.gmra.mxu0 %v412
        %v698 = vpop.f32.mrf.mxu0
        %v699 = vadd.f32 %v605, %v698
        %v700 = vpop.f32.mrf.mxu0
        %701 = vmatprep.mubr.f32.mxu0 0.0
        %702 = vmatmul.mubr.f32.gmra.mxu0 %v413
        %v703 = vpop.f32.mrf.mxu0
        %v704 = vadd.f32 %v605, %v703
        %v705 = vpop.f32.mrf.mxu0
        %706 = vmatprep.mubr.f32.mxu0 0.0
        %707 = vmatmul.mubr.f32.gmra.mxu0 %v414
        %v708 = vpop.f32.mrf.mxu0
        %v709 = vadd.f32 %v605, %v708
        %v710 = vpop.f32.mrf.mxu0
        %711 = vmatprep.mubr.f32.mxu0 0.0
        %712 = vmatmul.mubr.f32.gmra.mxu0 %v415
        %v713 = vpop.f32.mrf.mxu0
        %v714 = vadd.f32 %v605, %v713
        %v715 = vpop.f32.mrf.mxu0
        %716 = vmatprep.mubr.f32.mxu0 0.0
        %717 = vmatmul.mubr.f32.gmra.mxu0 %v416
        %v718 = vpop.f32.mrf.mxu0
        %v719 = vadd.f32 %v605, %v718
        %v720 = vpop.f32.mrf.mxu0
        %721 = vmatprep.mubr.f32.mxu0 0.0
        %722 = vmatmul.mubr.f32.gmra.mxu0 %v417
        %v723 = vpop.f32.mrf.mxu0
        %v724 = vadd.f32 %v605, %v723
        %v725 = vpop.f32.mrf.mxu0
        %726 = vmatprep.mubr.f32.mxu0 0.0
        %727 = vmatmul.mubr.f32.gmra.mxu0 %v418
        %v728 = vpop.f32.mrf.mxu0
        %v729 = vadd.f32 %v605, %v728
        %v730 = vpop.f32.mrf.mxu0
        %731 = vmatprep.mubr.f32.mxu0 0.0
        %732 = vmatmul.mubr.f32.gmra.mxu0 %v419
        %v733 = vpop.f32.mrf.mxu0
        %v734 = vadd.f32 %v605, %v733
        %v735 = vpop.f32.mrf.mxu0
        %736 = vmatprep.mubr.f32.mxu0 0.0
        %737 = vmatmul.mubr.f32.gmra.mxu0 %v420
        %v738 = vpop.f32.mrf.mxu0
        %v739 = vadd.f32 %v605, %v738
        %v740 = vpop.f32.mrf.mxu0
        %741 = vmatprep.mubr.f32.mxu0 0.0
        %742 = vmatmul.mubr.f32.gmra.mxu0 %v421
        %v743 = vpop.f32.mrf.mxu0
        %v744 = vadd.f32 %v605, %v743
        %v745 = vpop.f32.mrf.mxu0
        %746 = vmatprep.mubr.f32.mxu0 0.0
        %747 = vmatmul.mubr.f32.gmra.mxu0 %v422
        %v748 = vpop.f32.mrf.mxu0
        %v749 = vadd.f32 %v605, %v748
        %v750 = vpop.f32.mrf.mxu0
        %751 = vdwg.mxu0
        %v752 = vmax.f32 %v674, 0.0
        %v753 = vmax.f32 %v679, 0.0
        %v754 = vmax.f32 %v684, 0.0
        %v755 = vmax.f32 %v689, 0.0
        %v756 = vmax.f32 %v694, 0.0
        %v757 = vmax.f32 %v699, 0.0
        %v758 = vmax.f32 %v704, 0.0
        %v759 = vmax.f32 %v709, 0.0
        %v760 = vmax.f32 %v714, 0.0
        %v761 = vmax.f32 %v719, 0.0
        %v762 = vmax.f32 %v724, 0.0
        %v763 = vmax.f32 %v729, 0.0
        %v764 = vmax.f32 %v734, 0.0
        %v765 = vmax.f32 %v739, 0.0
        %v766 = vmax.f32 %v744, 0.0
        %v767 = vmax.f32 %v749, 0.0
        %v768 = vld [vmem:[#allocation8] sm:$0xff]
        %v769 = vld [vmem:[#allocation8 + $0x8] sm:$0xff]
        %v770 = vld [vmem:[#allocation8 + $0x10] sm:$0xff]
        %v771 = vld [vmem:[#allocation8 + $0x18] sm:$0xff]
        %v772 = vld [vmem:[#allocation8 + $0x20] sm:$0xff]
        %v773 = vld [vmem:[#allocation8 + $0x28] sm:$0xff]
        %v774 = vld [vmem:[#allocation8 + $0x30] sm:$0xff]
        %v775 = vld [vmem:[#allocation8 + $0x38] sm:$0xff]
        %v776 = vld [vmem:[#allocation8 + $0x40] sm:$0xff]
        %v777 = vld [vmem:[#allocation8 + $0x48] sm:$0xff]
        %v778 = vld [vmem:[#allocation8 + $0x50] sm:$0xff]
        %v779 = vld [vmem:[#allocation8 + $0x58] sm:$0xff]
        %v780 = vld [vmem:[#allocation8 + $0x60] sm:$0xff]
        %v781 = vld [vmem:[#allocation8 + $0x68] sm:$0xff]
        %v782 = vld [vmem:[#allocation8 + $0x70] sm:$0xff]
        %v783 = vld [vmem:[#allocation8 + $0x78] sm:$0xff]
        %784 = vmatprep.subr.mxu0 0.0
        %785 = vmatpush1.msra.mxu0 %v783
        %786 = vmatprep.subr.mxu0 0.0
        %787 = vmatpush1.msra.mxu0 %v782
        %788 = vmatprep.subr.mxu0 0.0
        %789 = vmatpush1.msra.mxu0 %v781
        %790 = vmatprep.subr.mxu0 0.0
        %791 = vmatpush1.msra.mxu0 %v780
        %792 = vmatprep.subr.mxu0 0.0
        %793 = vmatpush1.msra.mxu0 %v779
        %794 = vmatprep.subr.mxu0 0.0
        %795 = vmatpush1.msra.mxu0 %v778
        %796 = vmatprep.subr.mxu0 0.0
        %797 = vmatpush1.msra.mxu0 %v777
        %798 = vmatprep.subr.mxu0 0.0
        %799 = vmatpush1.msra.mxu0 %v776
        %800 = vmatprep.subr.mxu0 0.0
        %801 = vmatpush1.msra.mxu0 %v775
        %802 = vmatprep.subr.mxu0 0.0
        %803 = vmatpush1.msra.mxu0 %v774
        %804 = vmatprep.subr.mxu0 0.0
        %805 = vmatpush1.msra.mxu0 %v773
        %806 = vmatprep.subr.mxu0 0.0
        %807 = vmatpush1.msra.mxu0 %v772
        %808 = vmatprep.subr.mxu0 0.0
        %809 = vmatpush1.msra.mxu0 %v771
        %810 = vmatprep.subr.mxu0 0.0
        %811 = vmatpush1.msra.mxu0 %v770
        %812 = vmatprep.subr.mxu0 0.0
        %813 = vmatpush1.msra.mxu0 %v769
        %814 = vmatprep.subr.mxu0 0.0
        %815 = vmatpush1.msra.mxu0 %v768
        %816 = vmatprep.subr.mxu0 0.0
        %817 = vmatpush2.msra.mxu0 0.0
        %818 = vmatprep.subr.mxu0 0.0
        %819 = vmatpush2.msra.mxu0 0.0
        %820 = vmatprep.subr.mxu0 0.0
        %821 = vmatpush2.msra.mxu0 0.0
        %822 = vmatprep.subr.mxu0 0.0
        %823 = vmatpush2.msra.mxu0 0.0
        %824 = vmatprep.subr.mxu0 0.0
        %825 = vmatpush2.msra.mxu0 0.0
        %826 = vmatprep.subr.mxu0 0.0
        %827 = vmatpush2.msra.mxu0 0.0
        %828 = vmatprep.subr.mxu0 0.0
        %829 = vmatpush2.msra.mxu0 0.0
        %830 = vmatprep.subr.mxu0 0.0
        %831 = vmatpush2.msra.mxu0 0.0
        %832 = vmatprep.subr.mxu0 0.0
        %833 = vmatpush2.msra.mxu0 0.0
        %834 = vmatprep.subr.mxu0 0.0
        %835 = vmatpush2.msra.mxu0 0.0
        %836 = vmatprep.subr.mxu0 0.0
        %837 = vmatpush2.msra.mxu0 0.0
        %838 = vmatprep.subr.mxu0 0.0
        %839 = vmatpush2.msra.mxu0 0.0
        %840 = vmatprep.subr.mxu0 0.0
        %841 = vmatpush2.msra.mxu0 0.0
        %842 = vmatprep.subr.mxu0 0.0
        %843 = vmatpush2.msra.mxu0 0.0
        %844 = vmatprep.subr.mxu0 0.0
        %845 = vmatpush2.msra.mxu0 0.0
        %846 = vmatprep.subr.mxu0 0.0
        %847 = vmatpush2.msra.mxu0 0.0
        %848 = vmatprep.mubr.f32.mxu0 0.0
        %849 = vmatmul.mubr.f32.gmra.mxu0 %v752
        %v850 = vpop.f32.mrf.mxu0
        %v851 = vadd.f32 0.0, %v850
        %v852 = vpop.f32.mrf.mxu0
        %853 = vmatprep.mubr.f32.mxu0 0.0
        %854 = vmatmul.mubr.f32.gmra.mxu0 %v753
        %v855 = vpop.f32.mrf.mxu0
        %v856 = vadd.f32 0.0, %v855
        %v857 = vpop.f32.mrf.mxu0
        %858 = vmatprep.mubr.f32.mxu0 0.0
        %859 = vmatmul.mubr.f32.gmra.mxu0 %v754
        %v860 = vpop.f32.mrf.mxu0
        %v861 = vadd.f32 0.0, %v860
        %v862 = vpop.f32.mrf.mxu0
        %863 = vmatprep.mubr.f32.mxu0 0.0
        %864 = vmatmul.mubr.f32.gmra.mxu0 %v755
        %v865 = vpop.f32.mrf.mxu0
        %v866 = vadd.f32 0.0, %v865
        %v867 = vpop.f32.mrf.mxu0
        %868 = vmatprep.mubr.f32.mxu0 0.0
        %869 = vmatmul.mubr.f32.gmra.mxu0 %v756
        %v870 = vpop.f32.mrf.mxu0
        %v871 = vadd.f32 0.0, %v870
        %v872 = vpop.f32.mrf.mxu0
        %873 = vmatprep.mubr.f32.mxu0 0.0
        %874 = vmatmul.mubr.f32.gmra.mxu0 %v757
        %v875 = vpop.f32.mrf.mxu0
        %v876 = vadd.f32 0.0, %v875
        %v877 = vpop.f32.mrf.mxu0
        %878 = vmatprep.mubr.f32.mxu0 0.0
        %879 = vmatmul.mubr.f32.gmra.mxu0 %v758
        %v880 = vpop.f32.mrf.mxu0
        %v881 = vadd.f32 0.0, %v880
        %v882 = vpop.f32.mrf.mxu0
        %883 = vmatprep.mubr.f32.mxu0 0.0
        %884 = vmatmul.mubr.f32.gmra.mxu0 %v759
        %v885 = vpop.f32.mrf.mxu0
        %v886 = vadd.f32 0.0, %v885
        %v887 = vpop.f32.mrf.mxu0
        %888 = vmatprep.mubr.f32.mxu0 0.0
        %889 = vmatmul.mubr.f32.gmra.mxu0 %v760
        %v890 = vpop.f32.mrf.mxu0
        %v891 = vadd.f32 0.0, %v890
        %v892 = vpop.f32.mrf.mxu0
        %893 = vmatprep.mubr.f32.mxu0 0.0
        %894 = vmatmul.mubr.f32.gmra.mxu0 %v761
        %v895 = vpop.f32.mrf.mxu0
        %v896 = vadd.f32 0.0, %v895
        %v897 = vpop.f32.mrf.mxu0
        %898 = vmatprep.mubr.f32.mxu0 0.0
        %899 = vmatmul.mubr.f32.gmra.mxu0 %v762
        %v900 = vpop.f32.mrf.mxu0
        %v901 = vadd.f32 0.0, %v900
        %v902 = vpop.f32.mrf.mxu0
        %903 = vmatprep.mubr.f32.mxu0 0.0
        %904 = vmatmul.mubr.f32.gmra.mxu0 %v763
        %v905 = vpop.f32.mrf.mxu0
        %v906 = vadd.f32 0.0, %v905
        %v907 = vpop.f32.mrf.mxu0
        %908 = vmatprep.mubr.f32.mxu0 0.0
        %909 = vmatmul.mubr.f32.gmra.mxu0 %v764
        %v910 = vpop.f32.mrf.mxu0
        %v911 = vadd.f32 0.0, %v910
        %v912 = vpop.f32.mrf.mxu0
        %913 = vmatprep.mubr.f32.mxu0 0.0
        %914 = vmatmul.mubr.f32.gmra.mxu0 %v765
        %v915 = vpop.f32.mrf.mxu0
        %v916 = vadd.f32 0.0, %v915
        %v917 = vpop.f32.mrf.mxu0
        %918 = vmatprep.mubr.f32.mxu0 0.0
        %919 = vmatmul.mubr.f32.gmra.mxu0 %v766
        %v920 = vpop.f32.mrf.mxu0
        %v921 = vadd.f32 0.0, %v920
        %v922 = vpop.f32.mrf.mxu0
        %923 = vmatprep.mubr.f32.mxu0 0.0
        %924 = vmatmul.mubr.f32.gmra.mxu0 %v767
        %v925 = vpop.f32.mrf.mxu0
        %v926 = vadd.f32 0.0, %v925
        %v927 = vpop.f32.mrf.mxu0
        %928 = vdwg.mxu0
        %v929 = vld [vmem:[%s5] sm:$0x1]
        %v931 = vlaneseq
        %v932 = vshrl.u32 %v931, 7
        %v933 = vsub.s32 0, %v932
        %v934 = vrot.slane %v929, %v933
        %936 = vmatprep.subr.mxu0 0.0
        %937 = vmatpush1.msra.mxu0 %v926
        %938 = vmatprep.subr.mxu0 0.0
        %939 = vmatpush1.msra.mxu0 %v921
        %940 = vmatprep.subr.mxu0 0.0
        %941 = vmatpush1.msra.mxu0 %v916
        %942 = vmatprep.subr.mxu0 0.0
        %943 = vmatpush1.msra.mxu0 %v911
        %944 = vmatprep.subr.mxu0 0.0
        %945 = vmatpush1.msra.mxu0 %v906
        %946 = vmatprep.subr.mxu0 0.0
        %947 = vmatpush1.msra.mxu0 %v901
        %948 = vmatprep.subr.mxu0 0.0
        %949 = vmatpush1.msra.mxu0 %v896
        %950 = vmatprep.subr.mxu0 0.0
        %951 = vmatpush1.msra.mxu0 %v891
        %952 = vmatprep.subr.mxu0 0.0
        %953 = vmatpush1.msra.mxu0 %v886
        %954 = vmatprep.subr.mxu0 0.0
        %955 = vmatpush1.msra.mxu0 %v881
        %956 = vmatprep.subr.mxu0 0.0
        %957 = vmatpush1.msra.mxu0 %v876
        %958 = vmatprep.subr.mxu0 0.0
        %959 = vmatpush1.msra.mxu0 %v871
        %960 = vmatprep.subr.mxu0 0.0
        %961 = vmatpush1.msra.mxu0 %v866
        %962 = vmatprep.subr.mxu0 0.0
        %963 = vmatpush1.msra.mxu0 %v861
        %964 = vmatprep.subr.mxu0 0.0
        %965 = vmatpush1.msra.mxu0 %v856
        %966 = vmatprep.subr.mxu0 0.0
        %967 = vmatpush1.msra.mxu0 %v851
        %968 = vmatprep.subr.mxu0 0.0
        %969 = vmatpush2.msra.mxu0 0.0
        %970 = vmatprep.subr.mxu0 0.0
        %971 = vmatpush2.msra.mxu0 0.0
        %972 = vmatprep.subr.mxu0 0.0
        %973 = vmatpush2.msra.mxu0 0.0
        %974 = vmatprep.subr.mxu0 0.0
        %975 = vmatpush2.msra.mxu0 0.0
        %976 = vmatprep.subr.mxu0 0.0
        %977 = vmatpush2.msra.mxu0 0.0
        %978 = vmatprep.subr.mxu0 0.0
        %979 = vmatpush2.msra.mxu0 0.0
        %980 = vmatprep.subr.mxu0 0.0
        %981 = vmatpush2.msra.mxu0 0.0
        %982 = vmatprep.subr.mxu0 0.0
        %983 = vmatpush2.msra.mxu0 0.0
        %984 = vmatprep.subr.mxu0 0.0
        %985 = vmatpush2.msra.mxu0 0.0
        %986 = vmatprep.subr.mxu0 0.0
        %987 = vmatpush2.msra.mxu0 0.0
        %988 = vmatprep.subr.mxu0 0.0
        %989 = vmatpush2.msra.mxu0 0.0
        %990 = vmatprep.subr.mxu0 0.0
        %991 = vmatpush2.msra.mxu0 0.0
        %992 = vmatprep.subr.mxu0 0.0
        %993 = vmatpush2.msra.mxu0 0.0
        %994 = vmatprep.subr.mxu0 0.0
        %995 = vmatpush2.msra.mxu0 0.0
        %996 = vmatprep.subr.mxu0 0.0
        %997 = vmatpush2.msra.mxu0 0.0
        %998 = vmatprep.subr.mxu0 0.0
        %999 = vmatpush2.msra.mxu0 0.0
        %1000 = vmatprep.mubr.f32.mxu0 0.0
        %1001 = vmatmul.mubr.f32.gmra.mxu0 %v407
        %v1002 = vpop.f32.mrf.mxu0
        %v1003 = vadd.f32 %v934, %v1002
        %v1004 = vpop.f32.mrf.mxu0
        %1005 = vmatprep.mubr.f32.mxu0 0.0
        %1006 = vmatmul.mubr.f32.gmra.mxu0 %v408
        %v1007 = vpop.f32.mrf.mxu0
        %v1008 = vadd.f32 %v934, %v1007
        %v1009 = vpop.f32.mrf.mxu0
        %1010 = vmatprep.mubr.f32.mxu0 0.0
        %1011 = vmatmul.mubr.f32.gmra.mxu0 %v409
        %v1012 = vpop.f32.mrf.mxu0
        %v1013 = vadd.f32 %v934, %v1012
        %v1014 = vpop.f32.mrf.mxu0
        %1015 = vmatprep.mubr.f32.mxu0 0.0
        %1016 = vmatmul.mubr.f32.gmra.mxu0 %v410
        %v1017 = vpop.f32.mrf.mxu0
        %v1018 = vadd.f32 %v934, %v1017
        %v1019 = vpop.f32.mrf.mxu0
        %1020 = vmatprep.mubr.f32.mxu0 0.0
        %1021 = vmatmul.mubr.f32.gmra.mxu0 %v411
        %v1022 = vpop.f32.mrf.mxu0
        %v1023 = vadd.f32 %v934, %v1022
        %v1024 = vpop.f32.mrf.mxu0
        %1025 = vmatprep.mubr.f32.mxu0 0.0
        %1026 = vmatmul.mubr.f32.gmra.mxu0 %v412
        %v1027 = vpop.f32.mrf.mxu0
        %v1028 = vadd.f32 %v934, %v1027
        %v1029 = vpop.f32.mrf.mxu0
        %1030 = vmatprep.mubr.f32.mxu0 0.0
        %1031 = vmatmul.mubr.f32.gmra.mxu0 %v413
        %v1032 = vpop.f32.mrf.mxu0
        %v1033 = vadd.f32 %v934, %v1032
        %v1034 = vpop.f32.mrf.mxu0
        %1035 = vmatprep.mubr.f32.mxu0 0.0
        %1036 = vmatmul.mubr.f32.gmra.mxu0 %v414
        %v1037 = vpop.f32.mrf.mxu0
        %v1038 = vadd.f32 %v934, %v1037
        %v1039 = vpop.f32.mrf.mxu0
        %1040 = vmatprep.mubr.f32.mxu0 0.0
        %1041 = vmatmul.mubr.f32.gmra.mxu0 %v415
        %v1042 = vpop.f32.mrf.mxu0
        %v1043 = vadd.f32 %v934, %v1042
        %v1044 = vpop.f32.mrf.mxu0
        %1045 = vmatprep.mubr.f32.mxu0 0.0
        %1046 = vmatmul.mubr.f32.gmra.mxu0 %v416
        %v1047 = vpop.f32.mrf.mxu0
        %v1048 = vadd.f32 %v934, %v1047
        %v1049 = vpop.f32.mrf.mxu0
        %1050 = vmatprep.mubr.f32.mxu0 0.0
        %1051 = vmatmul.mubr.f32.gmra.mxu0 %v417
        %v1052 = vpop.f32.mrf.mxu0
        %v1053 = vadd.f32 %v934, %v1052
        %v1054 = vpop.f32.mrf.mxu0
        %1055 = vmatprep.mubr.f32.mxu0 0.0
        %1056 = vmatmul.mubr.f32.gmra.mxu0 %v418
        %v1057 = vpop.f32.mrf.mxu0
        %v1058 = vadd.f32 %v934, %v1057
        %v1059 = vpop.f32.mrf.mxu0
        %1060 = vmatprep.mubr.f32.mxu0 0.0
        %1061 = vmatmul.mubr.f32.gmra.mxu0 %v419
        %v1062 = vpop.f32.mrf.mxu0
        %v1063 = vadd.f32 %v934, %v1062
        %v1064 = vpop.f32.mrf.mxu0
        %1065 = vmatprep.mubr.f32.mxu0 0.0
        %1066 = vmatmul.mubr.f32.gmra.mxu0 %v420
        %v1067 = vpop.f32.mrf.mxu0
        %v1068 = vadd.f32 %v934, %v1067
        %v1069 = vpop.f32.mrf.mxu0
        %1070 = vmatprep.mubr.f32.mxu0 0.0
        %1071 = vmatmul.mubr.f32.gmra.mxu0 %v421
        %v1072 = vpop.f32.mrf.mxu0
        %v1073 = vadd.f32 %v934, %v1072
        %v1074 = vpop.f32.mrf.mxu0
        %1075 = vmatprep.mubr.f32.mxu0 0.0
        %1076 = vmatmul.mubr.f32.gmra.mxu0 %v422
        %v1077 = vpop.f32.mrf.mxu0
        %v1078 = vadd.f32 %v934, %v1077
        %v1079 = vpop.f32.mrf.mxu0
        %1080 = vdwg.mxu0
        %v1081 = vmax.f32 %v1003, 0.0
        %v1082 = vmax.f32 %v1008, 0.0
        %v1083 = vmax.f32 %v1013, 0.0
        %v1084 = vmax.f32 %v1018, 0.0
        %v1085 = vmax.f32 %v1023, 0.0
        %v1086 = vmax.f32 %v1028, 0.0
        %v1087 = vmax.f32 %v1033, 0.0
        %v1088 = vmax.f32 %v1038, 0.0
        %v1089 = vmax.f32 %v1043, 0.0
        %v1090 = vmax.f32 %v1048, 0.0
        %v1091 = vmax.f32 %v1053, 0.0
        %v1092 = vmax.f32 %v1058, 0.0
        %v1093 = vmax.f32 %v1063, 0.0
        %v1094 = vmax.f32 %v1068, 0.0
        %v1095 = vmax.f32 %v1073, 0.0
        %v1096 = vmax.f32 %v1078, 0.0
        %v1097 = vld [vmem:[#allocation10] sm:$0xff]
        %v1098 = vld [vmem:[#allocation10 + $0x8] sm:$0xff]
        %v1099 = vld [vmem:[#allocation10 + $0x10] sm:$0xff]
        %v1100 = vld [vmem:[#allocation10 + $0x18] sm:$0xff]
        %v1101 = vld [vmem:[#allocation10 + $0x20] sm:$0xff]
        %v1102 = vld [vmem:[#allocation10 + $0x28] sm:$0xff]
        %v1103 = vld [vmem:[#allocation10 + $0x30] sm:$0xff]
        %v1104 = vld [vmem:[#allocation10 + $0x38] sm:$0xff]
        %v1105 = vld [vmem:[#allocation10 + $0x40] sm:$0xff]
        %v1106 = vld [vmem:[#allocation10 + $0x48] sm:$0xff]
        %v1107 = vld [vmem:[#allocation10 + $0x50] sm:$0xff]
        %v1108 = vld [vmem:[#allocation10 + $0x58] sm:$0xff]
        %v1109 = vld [vmem:[#allocation10 + $0x60] sm:$0xff]
        %v1110 = vld [vmem:[#allocation10 + $0x68] sm:$0xff]
        %v1111 = vld [vmem:[#allocation10 + $0x70] sm:$0xff]
        %v1112 = vld [vmem:[#allocation10 + $0x78] sm:$0xff]
        %1113 = vmatprep.subr.mxu0 0.0
        %1114 = vmatpush1.msra.mxu0 %v1112
        %1115 = vmatprep.subr.mxu0 0.0
        %1116 = vmatpush1.msra.mxu0 %v1111
        %1117 = vmatprep.subr.mxu0 0.0
        %1118 = vmatpush1.msra.mxu0 %v1110
        %1119 = vmatprep.subr.mxu0 0.0
        %1120 = vmatpush1.msra.mxu0 %v1109
        %1121 = vmatprep.subr.mxu0 0.0
        %1122 = vmatpush1.msra.mxu0 %v1108
        %1123 = vmatprep.subr.mxu0 0.0
        %1124 = vmatpush1.msra.mxu0 %v1107
        %1125 = vmatprep.subr.mxu0 0.0
        %1126 = vmatpush1.msra.mxu0 %v1106
        %1127 = vmatprep.subr.mxu0 0.0
        %1128 = vmatpush1.msra.mxu0 %v1105
        %1129 = vmatprep.subr.mxu0 0.0
        %1130 = vmatpush1.msra.mxu0 %v1104
        %1131 = vmatprep.subr.mxu0 0.0
        %1132 = vmatpush1.msra.mxu0 %v1103
        %1133 = vmatprep.subr.mxu0 0.0
        %1134 = vmatpush1.msra.mxu0 %v1102
        %1135 = vmatprep.subr.mxu0 0.0
        %1136 = vmatpush1.msra.mxu0 %v1101
        %1137 = vmatprep.subr.mxu0 0.0
        %1138 = vmatpush1.msra.mxu0 %v1100
        %1139 = vmatprep.subr.mxu0 0.0
        %1140 = vmatpush1.msra.mxu0 %v1099
        %1141 = vmatprep.subr.mxu0 0.0
        %1142 = vmatpush1.msra.mxu0 %v1098
        %1143 = vmatprep.subr.mxu0 0.0
        %1144 = vmatpush1.msra.mxu0 %v1097
        %1145 = vmatprep.subr.mxu0 0.0
        %1146 = vmatpush2.msra.mxu0 0.0
        %1147 = vmatprep.subr.mxu0 0.0
        %1148 = vmatpush2.msra.mxu0 0.0
        %1149 = vmatprep.subr.mxu0 0.0
        %1150 = vmatpush2.msra.mxu0 0.0
        %1151 = vmatprep.subr.mxu0 0.0
        %1152 = vmatpush2.msra.mxu0 0.0
        %1153 = vmatprep.subr.mxu0 0.0
        %1154 = vmatpush2.msra.mxu0 0.0
        %1155 = vmatprep.subr.mxu0 0.0
        %1156 = vmatpush2.msra.mxu0 0.0
        %1157 = vmatprep.subr.mxu0 0.0
        %1158 = vmatpush2.msra.mxu0 0.0
        %1159 = vmatprep.subr.mxu0 0.0
        %1160 = vmatpush2.msra.mxu0 0.0
        %1161 = vmatprep.subr.mxu0 0.0
        %1162 = vmatpush2.msra.mxu0 0.0
        %1163 = vmatprep.subr.mxu0 0.0
        %1164 = vmatpush2.msra.mxu0 0.0
        %1165 = vmatprep.subr.mxu0 0.0
        %1166 = vmatpush2.msra.mxu0 0.0
        %1167 = vmatprep.subr.mxu0 0.0
        %1168 = vmatpush2.msra.mxu0 0.0
        %1169 = vmatprep.subr.mxu0 0.0
        %1170 = vmatpush2.msra.mxu0 0.0
        %1171 = vmatprep.subr.mxu0 0.0
        %1172 = vmatpush2.msra.mxu0 0.0
        %1173 = vmatprep.subr.mxu0 0.0
        %1174 = vmatpush2.msra.mxu0 0.0
        %1175 = vmatprep.subr.mxu0 0.0
        %1176 = vmatpush2.msra.mxu0 0.0
        %1177 = vmatprep.mubr.f32.mxu0 0.0
        %1178 = vmatmul.mubr.f32.gmra.mxu0 %v1081
        %v1179 = vpop.f32.mrf.mxu0
        %v1180 = vadd.f32 0.0, %v1179
        %v1181 = vpop.f32.mrf.mxu0
        %1182 = vmatprep.mubr.f32.mxu0 0.0
        %1183 = vmatmul.mubr.f32.gmra.mxu0 %v1082
        %v1184 = vpop.f32.mrf.mxu0
        %v1185 = vadd.f32 0.0, %v1184
        %v1186 = vpop.f32.mrf.mxu0
        %1187 = vmatprep.mubr.f32.mxu0 0.0
        %1188 = vmatmul.mubr.f32.gmra.mxu0 %v1083
        %v1189 = vpop.f32.mrf.mxu0
        %v1190 = vadd.f32 0.0, %v1189
        %v1191 = vpop.f32.mrf.mxu0
        %1192 = vmatprep.mubr.f32.mxu0 0.0
        %1193 = vmatmul.mubr.f32.gmra.mxu0 %v1084
        %v1194 = vpop.f32.mrf.mxu0
        %v1195 = vadd.f32 0.0, %v1194
        %v1196 = vpop.f32.mrf.mxu0
        %1197 = vmatprep.mubr.f32.mxu0 0.0
        %1198 = vmatmul.mubr.f32.gmra.mxu0 %v1085
        %v1199 = vpop.f32.mrf.mxu0
        %v1200 = vadd.f32 0.0, %v1199
        %v1201 = vpop.f32.mrf.mxu0
        %1202 = vmatprep.mubr.f32.mxu0 0.0
        %1203 = vmatmul.mubr.f32.gmra.mxu0 %v1086
        %v1204 = vpop.f32.mrf.mxu0
        %v1205 = vadd.f32 0.0, %v1204
        %v1206 = vpop.f32.mrf.mxu0
        %1207 = vmatprep.mubr.f32.mxu0 0.0
        %1208 = vmatmul.mubr.f32.gmra.mxu0 %v1087
        %v1209 = vpop.f32.mrf.mxu0
        %v1210 = vadd.f32 0.0, %v1209
        %v1211 = vpop.f32.mrf.mxu0
        %1212 = vmatprep.mubr.f32.mxu0 0.0
        %1213 = vmatmul.mubr.f32.gmra.mxu0 %v1088
        %v1214 = vpop.f32.mrf.mxu0
        %v1215 = vadd.f32 0.0, %v1214
        %v1216 = vpop.f32.mrf.mxu0
        %1217 = vmatprep.mubr.f32.mxu0 0.0
        %1218 = vmatmul.mubr.f32.gmra.mxu0 %v1089
        %v1219 = vpop.f32.mrf.mxu0
        %v1220 = vadd.f32 0.0, %v1219
        %v1221 = vpop.f32.mrf.mxu0
        %1222 = vmatprep.mubr.f32.mxu0 0.0
        %1223 = vmatmul.mubr.f32.gmra.mxu0 %v1090
        %v1224 = vpop.f32.mrf.mxu0
        %v1225 = vadd.f32 0.0, %v1224
        %v1226 = vpop.f32.mrf.mxu0
        %1227 = vmatprep.mubr.f32.mxu0 0.0
        %1228 = vmatmul.mubr.f32.gmra.mxu0 %v1091
        %v1229 = vpop.f32.mrf.mxu0
        %v1230 = vadd.f32 0.0, %v1229
        %v1231 = vpop.f32.mrf.mxu0
        %1232 = vmatprep.mubr.f32.mxu0 0.0
        %1233 = vmatmul.mubr.f32.gmra.mxu0 %v1092
        %v1234 = vpop.f32.mrf.mxu0
        %v1235 = vadd.f32 0.0, %v1234
        %v1236 = vpop.f32.mrf.mxu0
        %1237 = vmatprep.mubr.f32.mxu0 0.0
        %1238 = vmatmul.mubr.f32.gmra.mxu0 %v1093
        %v1239 = vpop.f32.mrf.mxu0
        %v1240 = vadd.f32 0.0, %v1239
        %v1241 = vpop.f32.mrf.mxu0
        %1242 = vmatprep.mubr.f32.mxu0 0.0
        %1243 = vmatmul.mubr.f32.gmra.mxu0 %v1094
        %v1244 = vpop.f32.mrf.mxu0
        %v1245 = vadd.f32 0.0, %v1244
        %v1246 = vpop.f32.mrf.mxu0
        %1247 = vmatprep.mubr.f32.mxu0 0.0
        %1248 = vmatmul.mubr.f32.gmra.mxu0 %v1095
        %v1249 = vpop.f32.mrf.mxu0
        %v1250 = vadd.f32 0.0, %v1249
        %v1251 = vpop.f32.mrf.mxu0
        %1252 = vmatprep.mubr.f32.mxu0 0.0
        %1253 = vmatmul.mubr.f32.gmra.mxu0 %v1096
        %v1254 = vpop.f32.mrf.mxu0
        %v1255 = vadd.f32 0.0, %v1254
        %v1256 = vpop.f32.mrf.mxu0
        %1257 = vdwg.mxu0
        %v1258 = vld [vmem:[%s7] sm:$0x1]
        %v1260 = vlaneseq
        %v1261 = vshrl.u32 %v1260, 7
        %v1262 = vsub.s32 0, %v1261
        %v1263 = vrot.slane %v1258, %v1262
        %1265 = vmatprep.subr.mxu0 0.0
        %1266 = vmatpush1.msra.mxu0 %v1255
        %1267 = vmatprep.subr.mxu0 0.0
        %1268 = vmatpush1.msra.mxu0 %v1250
        %1269 = vmatprep.subr.mxu0 0.0
        %1270 = vmatpush1.msra.mxu0 %v1245
        %1271 = vmatprep.subr.mxu0 0.0
        %1272 = vmatpush1.msra.mxu0 %v1240
        %1273 = vmatprep.subr.mxu0 0.0
        %1274 = vmatpush1.msra.mxu0 %v1235
        %1275 = vmatprep.subr.mxu0 0.0
        %1276 = vmatpush1.msra.mxu0 %v1230
        %1277 = vmatprep.subr.mxu0 0.0
        %1278 = vmatpush1.msra.mxu0 %v1225
        %1279 = vmatprep.subr.mxu0 0.0
        %1280 = vmatpush1.msra.mxu0 %v1220
        %1281 = vmatprep.subr.mxu0 0.0
        %1282 = vmatpush1.msra.mxu0 %v1215
        %1283 = vmatprep.subr.mxu0 0.0
        %1284 = vmatpush1.msra.mxu0 %v1210
        %1285 = vmatprep.subr.mxu0 0.0
        %1286 = vmatpush1.msra.mxu0 %v1205
        %1287 = vmatprep.subr.mxu0 0.0
        %1288 = vmatpush1.msra.mxu0 %v1200
        %1289 = vmatprep.subr.mxu0 0.0
        %1290 = vmatpush1.msra.mxu0 %v1195
        %1291 = vmatprep.subr.mxu0 0.0
        %1292 = vmatpush1.msra.mxu0 %v1190
        %1293 = vmatprep.subr.mxu0 0.0
        %1294 = vmatpush1.msra.mxu0 %v1185
        %1295 = vmatprep.subr.mxu0 0.0
        %1296 = vmatpush1.msra.mxu0 %v1180
        %1297 = vmatprep.subr.mxu0 0.0
        %1298 = vmatpush2.msra.mxu0 0.0
        %1299 = vmatprep.subr.mxu0 0.0
        %1300 = vmatpush2.msra.mxu0 0.0
        %1301 = vmatprep.subr.mxu0 0.0
        %1302 = vmatpush2.msra.mxu0 0.0
        %1303 = vmatprep.subr.mxu0 0.0
        %1304 = vmatpush2.msra.mxu0 0.0
        %1305 = vmatprep.subr.mxu0 0.0
        %1306 = vmatpush2.msra.mxu0 0.0
        %1307 = vmatprep.subr.mxu0 0.0
        %1308 = vmatpush2.msra.mxu0 0.0
        %1309 = vmatprep.subr.mxu0 0.0
        %1310 = vmatpush2.msra.mxu0 0.0
        %1311 = vmatprep.subr.mxu0 0.0
        %1312 = vmatpush2.msra.mxu0 0.0
        %1313 = vmatprep.subr.mxu0 0.0
        %1314 = vmatpush2.msra.mxu0 0.0
        %1315 = vmatprep.subr.mxu0 0.0
        %1316 = vmatpush2.msra.mxu0 0.0
        %1317 = vmatprep.subr.mxu0 0.0
        %1318 = vmatpush2.msra.mxu0 0.0
        %1319 = vmatprep.subr.mxu0 0.0
        %1320 = vmatpush2.msra.mxu0 0.0
        %1321 = vmatprep.subr.mxu0 0.0
        %1322 = vmatpush2.msra.mxu0 0.0
        %1323 = vmatprep.subr.mxu0 0.0
        %1324 = vmatpush2.msra.mxu0 0.0
        %1325 = vmatprep.subr.mxu0 0.0
        %1326 = vmatpush2.msra.mxu0 0.0
        %1327 = vmatprep.subr.mxu0 0.0
        %1328 = vmatpush2.msra.mxu0 0.0
        %1329 = vmatprep.mubr.f32.mxu0 0.0
        %1330 = vmatmul.mubr.f32.gmra.mxu0 %v407
        %v1331 = vpop.f32.mrf.mxu0
        %v1332 = vadd.f32 %v1263, %v1331
        %v1333 = vpop.f32.mrf.mxu0
        %1334 = vmatprep.mubr.f32.mxu0 0.0
        %1335 = vmatmul.mubr.f32.gmra.mxu0 %v408
        %v1336 = vpop.f32.mrf.mxu0
        %v1337 = vadd.f32 %v1263, %v1336
        %v1338 = vpop.f32.mrf.mxu0
        %1339 = vmatprep.mubr.f32.mxu0 0.0
        %1340 = vmatmul.mubr.f32.gmra.mxu0 %v409
        %v1341 = vpop.f32.mrf.mxu0
        %v1342 = vadd.f32 %v1263, %v1341
        %v1343 = vpop.f32.mrf.mxu0
        %1344 = vmatprep.mubr.f32.mxu0 0.0
        %1345 = vmatmul.mubr.f32.gmra.mxu0 %v410
        %v1346 = vpop.f32.mrf.mxu0
        %v1347 = vadd.f32 %v1263, %v1346
        %v1348 = vpop.f32.mrf.mxu0
        %1349 = vmatprep.mubr.f32.mxu0 0.0
        %1350 = vmatmul.mubr.f32.gmra.mxu0 %v411
        %v1351 = vpop.f32.mrf.mxu0
        %v1352 = vadd.f32 %v1263, %v1351
        %v1353 = vpop.f32.mrf.mxu0
        %1354 = vmatprep.mubr.f32.mxu0 0.0
        %1355 = vmatmul.mubr.f32.gmra.mxu0 %v412
        %v1356 = vpop.f32.mrf.mxu0
        %v1357 = vadd.f32 %v1263, %v1356
        %v1358 = vpop.f32.mrf.mxu0
        %1359 = vmatprep.mubr.f32.mxu0 0.0
        %1360 = vmatmul.mubr.f32.gmra.mxu0 %v413
        %v1361 = vpop.f32.mrf.mxu0
        %v1362 = vadd.f32 %v1263, %v1361
        %v1363 = vpop.f32.mrf.mxu0
        %1364 = vmatprep.mubr.f32.mxu0 0.0
        %1365 = vmatmul.mubr.f32.gmra.mxu0 %v414
        %v1366 = vpop.f32.mrf.mxu0
        %v1367 = vadd.f32 %v1263, %v1366
        %v1368 = vpop.f32.mrf.mxu0
        %1369 = vmatprep.mubr.f32.mxu0 0.0
        %1370 = vmatmul.mubr.f32.gmra.mxu0 %v415
        %v1371 = vpop.f32.mrf.mxu0
        %v1372 = vadd.f32 %v1263, %v1371
        %v1373 = vpop.f32.mrf.mxu0
        %1374 = vmatprep.mubr.f32.mxu0 0.0
        %1375 = vmatmul.mubr.f32.gmra.mxu0 %v416
        %v1376 = vpop.f32.mrf.mxu0
        %v1377 = vadd.f32 %v1263, %v1376
        %v1378 = vpop.f32.mrf.mxu0
        %1379 = vmatprep.mubr.f32.mxu0 0.0
        %1380 = vmatmul.mubr.f32.gmra.mxu0 %v417
        %v1381 = vpop.f32.mrf.mxu0
        %v1382 = vadd.f32 %v1263, %v1381
        %v1383 = vpop.f32.mrf.mxu0
        %1384 = vmatprep.mubr.f32.mxu0 0.0
        %1385 = vmatmul.mubr.f32.gmra.mxu0 %v418
        %v1386 = vpop.f32.mrf.mxu0
        %v1387 = vadd.f32 %v1263, %v1386
        %v1388 = vpop.f32.mrf.mxu0
        %1389 = vmatprep.mubr.f32.mxu0 0.0
        %1390 = vmatmul.mubr.f32.gmra.mxu0 %v419
        %v1391 = vpop.f32.mrf.mxu0
        %v1392 = vadd.f32 %v1263, %v1391
        %v1393 = vpop.f32.mrf.mxu0
        %1394 = vmatprep.mubr.f32.mxu0 0.0
        %1395 = vmatmul.mubr.f32.gmra.mxu0 %v420
        %v1396 = vpop.f32.mrf.mxu0
        %v1397 = vadd.f32 %v1263, %v1396
        %v1398 = vpop.f32.mrf.mxu0
        %1399 = vmatprep.mubr.f32.mxu0 0.0
        %1400 = vmatmul.mubr.f32.gmra.mxu0 %v421
        %v1401 = vpop.f32.mrf.mxu0
        %v1402 = vadd.f32 %v1263, %v1401
        %v1403 = vpop.f32.mrf.mxu0
        %1404 = vmatprep.mubr.f32.mxu0 0.0
        %1405 = vmatmul.mubr.f32.gmra.mxu0 %v422
        %v1406 = vpop.f32.mrf.mxu0
        %v1407 = vadd.f32 %v1263, %v1406
        %v1408 = vpop.f32.mrf.mxu0
        %1409 = vdwg.mxu0
        %1410 = vst [vmem:[%s406] sm:$0xff] %v1332
        %1411 = vst [vmem:[%s406 + $0x8] sm:$0xff] %v1337
        %1412 = vst [vmem:[%s406 + $0x10] sm:$0xff] %v1342
        %1413 = vst [vmem:[%s406 + $0x18] sm:$0xff] %v1347
        %1414 = vst [vmem:[%s406 + $0x20] sm:$0xff] %v1352
        %1415 = vst [vmem:[%s406 + $0x28] sm:$0xff] %v1357
        %1416 = vst [vmem:[%s406 + $0x30] sm:$0xff] %v1362
        %1417 = vst [vmem:[%s406 + $0x38] sm:$0xff] %v1367
        %1418 = vst [vmem:[%s406 + $0x40] sm:$0xff] %v1372
        %1419 = vst [vmem:[%s406 + $0x48] sm:$0xff] %v1377
        %1420 = vst [vmem:[%s406 + $0x50] sm:$0xff] %v1382
        %1421 = vst [vmem:[%s406 + $0x58] sm:$0xff] %v1387
        %1422 = vst [vmem:[%s406 + $0x60] sm:$0xff] %v1392
        %1423 = vst [vmem:[%s406 + $0x68] sm:$0xff] %v1397
        %1424 = vst [vmem:[%s406 + $0x70] sm:$0xff] %v1402
        %1425 = vst [vmem:[%s406 + $0x78] sm:$0xff] %v1407
        %s1426 = sand.u32 %s215, 1
        %s1427 = scalar_lea.sflag [#allocation4], %s1426
        %s1428 = sand.u32 %s215, 1
        %s1429 = smul.addr %s1428, 128
        %s1430 = scalar_lea.vmem [#allocation11], %s1429
        // Predicated region
        $region73: #{tpu_custom_call.1} parent=51 // pred_check
          %p1431 = pneg %p225
        $region74: #{tpu_custom_call.1} parent=51 // pred_check_branch
          %1433 = sbr.rel (%p1431) target = $region76
        $region75: #{tpu_custom_call.1} parent=51 // pred_region
          %s1435 = ssub.s32 2048, 2048
          %1436 = vsyncadd %s1427, %s1435
          %s1437 = smul.addr %s29, 16
          %s1438 = smul.addr %s1437, 128
          %s1439 = scalar_lea.hbm %s8, %s1438
          %s1440 = sshll.u32 %s1430, 4
          %s1441 = int_to_ptr.vmem [resolvable:$true] %s1440
          %1446 = dma.vmem_to_hbm [thread:$0]  %s1441, 2048, %s1439, %s1427, 128, 128, 8
        $region76: #{tpu_custom_call.1} parent=51 // pred_fallthru
          _
      $region52: #{tpu_custom_call.1} parent=5 // pred_fallthru
        _
      %p1447 = scmp.le.s32.totalorder 2, %s24
      // Predicated region
      $region77: #{tpu_custom_call.1} parent=5 // pred_check
        %p1448 = pneg %p1447
      $region78: #{tpu_custom_call.1} parent=5 // pred_check_branch
        %1450 = sbr.rel (%p1448) target = $region80
      $region79: #{tpu_custom_call.1} parent=5 // pred_region
        %s1451 = ssub.s32 %s24, 2
        // Predicated region
        $region81: #{tpu_custom_call.1} parent=79 // pred_check
          %p1452 = pneg %p231
        $region82: #{tpu_custom_call.1} parent=79 // pred_check_branch
          %1454 = sbr.rel (%p1452) target = $region84
        $region83: #{tpu_custom_call.1} parent=79 // pred_region
          %s1455 = sand.u32 %s216, 1
          %s1456 = scalar_lea.sflag [#allocation4], %s1455
          %s1457 = sand.u32 %s216, 1
          %s1458 = smul.addr %s1457, 128
          %s1459 = scalar_lea.vmem [#allocation11], %s1458
          %1460 = dma.done %s1456, 2048
        $region84: #{tpu_custom_call.1} parent=79 // pred_fallthru
          _
      $region80: #{tpu_custom_call.1} parent=5 // pred_fallthru
        _
    $region6: #{tpu_custom_call.1} parent=1 // loop_footer
      %s28 = sadd.s32 1, %s24
    $region7: #{tpu_custom_call.1} parent=1 // loop_footer_branch
      %23 = sbr.rel target = $region3
    $region8: #{tpu_custom_call.1} parent=1 // loop_exit
      _
    %1461 = vsyncpa [#allocation3], 1
    %s1462 = scalar_lea.sflag [#allocation3], 1
    %1463 = vsyncpa %s1462, 1
    %1464 = vsyncpa [#allocation6], 1
    %s1465 = scalar_lea.sflag [#allocation6], 1
    %1466 = vsyncpa %s1465, 1
    %1467 = vsyncpa [#allocation9], 1
    %1468 = vsyncpa [#allocation4], 1
    %s1469 = scalar_lea.sflag [#allocation4], 1
    %1470 = vsyncpa %s1469, 1

</llo_original>
